<compile_context>
chip_gen: v6e
topology: v6e:2x2x1
jax: 0.10.0
libtpu: 0.0.40
codegen_flags: <defaults>
</compile_context>

<pallas_src>
import jax
import jax.numpy as jnp
from jax.experimental import pallas as pl
from jax.experimental.pallas import tpu as pltpu

# MXU operand precision. bf16 is MXU-native on every generation and halves
# operand passes on the serial recurrent matmuls; accumulation is kept f32.
# Use jnp.float32 here for bit-tight (1e-4) matching against the reference.
MXU_OPERAND_DTYPE = jnp.bfloat16


# ----------------------------------------------------------------------------
# Fused Pallas kernel: all LSTM layers (wavefront-interleaved) + mu head
# ----------------------------------------------------------------------------
def make_fused_lstm_actor_kernel(num_layers, Bp, T, H):
    """Kernel args (in order):
        x_ref                      [T*Bp, D]   time-major, batch padded to Bp
        (w_ih, w_hh, b) x L        [D_in,4H], [H,4H] (MXU dtype), [1,4H] (f32)
        w_mu, b_mu                 [H, A] (MXU dtype), [1, A] (f32)
        mu_ref (output)            [Bp, A] f32
    Weights arrive with the candidate-gate columns (2H:3H) pre-scaled by 2
    so that tanh(x) = 2*sigmoid(2x) - 1 can be used.
    """

    def kernel(*args):
        x_ref = args[0]
        layer_refs = args[1:1 + 3 * num_layers]
        wmu_ref = args[1 + 3 * num_layers]
        bmu_ref = args[2 + 3 * num_layers]
        mu_ref = args[3 + 3 * num_layers]

        mxu = MXU_OPERAND_DTYPE
        w_ih = [layer_refs[3 * l + 0][...] for l in range(num_layers)]
        w_hh = [layer_refs[3 * l + 1][...] for l in range(num_layers)]
        bias = [layer_refs[3 * l + 2][...] for l in range(num_layers)]

        # Hoisted layer-0 input projection: one [T*Bp, D] @ [D, 4H] MXU matmul
        # for every time step at once; independent of h, so off the serial chain.
        gx0 = jnp.dot(x_ref[...], w_ih[0],
                      preferred_element_type=jnp.float32) + bias[0]   # [T*Bp, 4H]

        h = [jnp.zeros((Bp, H), jnp.float32) for _ in range(num_layers)]
        c = [jnp.zeros((Bp, H), jnp.float32) for _ in range(num_layers)]

        # Wavefront over anti-diagonals: layer l at step s processes t = s - l,
        # consuming layer l-1's output for the same t (computed on the previous
        # diagonal).  All cells on one diagonal are mutually independent.
        for s in range(T + num_layers - 1):
            h_prev = list(h)                       # state as of previous diagonal
            for layer in range(num_layers):
                t = s - layer
                if t < 0 or t >= T:
                    continue
                if layer == 0:
                    # Whole-vreg row band (Bp is a sublane multiple): no relayout.
                    g_in = gx0[t * Bp:(t + 1) * Bp, :]
                else:
                    g_in = jnp.dot(h_prev[layer - 1].astype(mxu), w_ih[layer],
                                   preferred_element_type=jnp.float32) + bias[layer]
                g = g_in + jnp.dot(h[layer].astype(mxu), w_hh[layer],
                                   preferred_element_type=jnp.float32)   # [Bp, 4H]
                # Single wide EUP push; candidate column was pre-scaled by 2, so
                # its tanh is recovered on the VPU as 2*sigmoid(2x) - 1.
                sg = jax.nn.sigmoid(g)
                i_g = sg[:, 0 * H:1 * H]
                f_g = sg[:, 1 * H:2 * H]
                g_g = 2.0 * sg[:, 2 * H:3 * H] - 1.0
                o_g = sg[:, 3 * H:4 * H]
                c_new = f_g * c[layer] + i_g * g_g
                h[layer] = o_g * jnp.tanh(c_new)
                c[layer] = c_new

        # Actor head: mu = h_last @ W_mu + b_mu.
        mu_ref[...] = (jnp.dot(h[num_layers - 1].astype(mxu), wmu_ref[...],
                               preferred_element_type=jnp.float32)
                       + bmu_ref[...])

    return kernel


# ----------------------------------------------------------------------------
# One-time weight preparation (outside the per-call path)
# ----------------------------------------------------------------------------
def _prescale_candidate_cols(w, H):
    """Multiply the candidate-gate columns [2H:3H) by 2 (tanh-from-sigmoid)."""
    scale = jnp.concatenate(
        [jnp.ones((1, 2 * H), w.dtype),
         jnp.full((1, H), 2.0, w.dtype),
         jnp.ones((1, H), w.dtype)], axis=1)
    return w * scale


def prepare_kernel_params(lstm_params, w_mu):
    """Pre-scale candidate columns and cast matmul weights to the MXU dtype."""
    H = lstm_params[0][1].shape[0]
    mxu = MXU_OPERAND_DTYPE
    prepped = []
    for (w_ih, w_hh, b) in lstm_params:
        prepped.append((
            _prescale_candidate_cols(w_ih, H).astype(mxu),
            _prescale_candidate_cols(w_hh, H).astype(mxu),
            _prescale_candidate_cols(b, H),            # bias stays f32
        ))
    return prepped, w_mu.astype(mxu)


# ----------------------------------------------------------------------------
# Wrapper
# ----------------------------------------------------------------------------
def fused_forward(s_btd, lstm_params, w_mu, b_mu):
    B, T, D = s_btd.shape
    H = lstm_params[0][1].shape[0]
    A = w_mu.shape[1]
    L = len(lstm_params)
    Bp = ((B + 7) // 8) * 8          # pad batch to a sublane multiple

    # Time-major, batch-padded, flattened input.  The zero-pad has to happen
    # outside the kernel anyway; XLA fuses pad+transpose+reshape+cast into one
    # tiny (~1 KiB) op.
    x = jnp.transpose(s_btd, (1, 0, 2))                       # [T, B, D]
    x = jnp.pad(x, ((0, 0), (0, Bp - B), (0, 0)))             # [T, Bp, D]
    x_flat = x.reshape(T * Bp, D).astype(MXU_OPERAND_DTYPE)   # [T*Bp, D]

    in_specs = [pl.BlockSpec((T * Bp, D), lambda: (0, 0))]
    flat_args = [x_flat]
    for (w_ih, w_hh, b) in lstm_params:
        d_in = w_ih.shape[0]
        in_specs += [
            pl.BlockSpec((d_in, 4 * H), lambda: (0, 0)),
            pl.BlockSpec((H, 4 * H), lambda: (0, 0)),
            pl.BlockSpec((1, 4 * H), lambda: (0, 0)),
        ]
        flat_args += [w_ih, w_hh, b]
    in_specs += [
        pl.BlockSpec((H, A), lambda: (0, 0)),
        pl.BlockSpec((1, A), lambda: (0, 0)),
    ]
    flat_args += [w_mu, b_mu]

    mu_p = pl.pallas_call(
        make_fused_lstm_actor_kernel(L, Bp, T, H),
        out_shape=jax.ShapeDtypeStruct((Bp, A), jnp.float32),
        in_specs=in_specs,
        out_specs=pl.BlockSpec((Bp, A), lambda: (0, 0)),
    )(*flat_args)
    return mu_p[:B]


@jax.jit
def recurrent_actor_prob_forward(s, lstm_params, w_mu, b_mu, sigma_param):
    """Forward pass of RecurrentActorProb. Returns ((mu, sigma), None)."""
    s = s.astype(jnp.float32)
    if s.ndim == 2:                                   # [B, D] -> [B, 1, D]
        s = s[:, None, :]
    mu = fused_forward(s, lstm_params, w_mu, b_mu)
    # sigma is independent of the hidden state: exp(sigma_param) broadcast [B, A].
    sigma = jnp.broadcast_to(jnp.exp(sigma_param.reshape(1, -1)), mu.shape)
    return (mu, sigma), None


# ----------------------------------------------------------------------------
# Deterministic parameter init (PyTorch shapes, stored transposed; synthetic)
# ----------------------------------------------------------------------------
def init_params(key, layer_num, state_dim, hidden, action_dim):
    lstm_params = []
    for layer in range(layer_num):
        in_dim = state_dim if layer == 0 else hidden
        key, k1, k2, k3, k4 = jax.random.split(key, 5)
        # PyTorch weight_ih_l{l} is [4H, in_dim]; stored transposed [in_dim, 4H],
        # gate order (i, f, g, o).
        w_ih = 0.1 * jax.random.normal(k1, (in_dim, 4 * hidden), jnp.float32)
        w_hh = 0.1 * jax.random.normal(k2, (hidden, 4 * hidden), jnp.float32)
        b_ih = 0.1 * jax.random.normal(k3, (4 * hidden,), jnp.float32)
        b_hh = 0.1 * jax.random.normal(k4, (4 * hidden,), jnp.float32)
        b = (b_ih + b_hh).reshape(1, 4 * hidden)
        lstm_params.append((w_ih, w_hh, b))
    key, k5, k6 = jax.random.split(key, 3)
    w_mu = 0.1 * jax.random.normal(k5, (hidden, action_dim), jnp.float32)
    b_mu = 0.1 * jax.random.normal(k6, (1, action_dim), jnp.float32)
    # Module init: sigma = nn.Parameter(torch.zeros(action_dim, 1)); forward
    # uses sigma.view(1, -1) -> [1, A] zeros.
    sigma_param = jnp.zeros((1, action_dim), jnp.float32)
    return lstm_params, w_mu, b_mu, sigma_param


# ----------------------------------------------------------------------------
# Pure-JAX reference (uses the raw, unscaled f32 parameters)
# ----------------------------------------------------------------------------
def ref_forward(s, lstm_params, w_mu, b_mu, sigma_param):
    s = s.astype(jnp.float32)
    if s.ndim == 2:
        s = s[:, None, :]
    x = s
    B = x.shape[0]
    for (w_ih, w_hh, b) in lstm_params:
        H = w_hh.shape[0]

        def step(carry, x_t, w_ih=w_ih, w_hh=w_hh, b=b, H=H):
            h, c = carry
            g = x_t @ w_ih + h @ w_hh + b[0]
            i_g = jax.nn.sigmoid(g[:, 0 * H:1 * H])
            f_g = jax.nn.sigmoid(g[:, 1 * H:2 * H])
            g_g = jnp.tanh(g[:, 2 * H:3 * H])
            o_g = jax.nn.sigmoid(g[:, 3 * H:4 * H])
            c2 = f_g * c + i_g * g_g
            h2 = o_g * jnp.tanh(c2)
            return (h2, c2), h2

        x_tbd = jnp.transpose(x, (1, 0, 2))
        (_, _), hs = jax.lax.scan(step,
                                  (jnp.zeros((B, H)), jnp.zeros((B, H))),
                                  x_tbd)
        x = jnp.transpose(hs, (1, 0, 2))
    last = x[:, -1]
    mu = last @ w_mu + b_mu[0]
    sigma = jnp.exp(sigma_param[0] + jnp.zeros_like(mu))
    return mu, sigma


# ----------------------------------------------------------------------------
# Main
# ----------------------------------------------------------------------------
if __name__ == "__main__":
    # RecurrentActorProb(layer_num=2, state_shape=(16,), action_shape=(4,),
    #                    max_action=1.0, hidden_layer_size=32)
    layer_num = 2
    state_dim = 16
    action_dim = 4
    hidden = 32
    B, T = 2, 8

    key = jax.random.PRNGKey(0)
    key, pkey, skey, skey2 = jax.random.split(key, 4)
    lstm_params, w_mu, b_mu, sigma_param = init_params(
        pkey, layer_num, state_dim, hidden, action_dim)
    k_lstm_params, k_w_mu = prepare_kernel_params(lstm_params, w_mu)

    # bf16 MXU operands (f32 accumulation) need a looser check than the f32 path.
    tol = 1e-4 if MXU_OPERAND_DTYPE == jnp.float32 else 2e-2

    # 3-D input [B, T, state_dim]
    s = jax.random.normal(skey, (B, T, state_dim), jnp.float32)
    (mu, sigma), state = recurrent_actor_prob_forward(
        s, k_lstm_params, k_w_mu, b_mu, sigma_param)
    jax.block_until_ready((mu, sigma))

    mu_ref, sigma_ref = ref_forward(s, lstm_params, w_mu, b_mu, sigma_param)
    assert mu.shape == (B, action_dim) and sigma.shape == (B, action_dim)
    assert jnp.allclose(mu, mu_ref, atol=tol, rtol=tol)
    assert jnp.allclose(sigma, sigma_ref, atol=tol, rtol=tol)
    assert state is None

    # 2-D input [B, state_dim] (module adds a time axis of length 1)
    s2 = jax.random.normal(skey2, (B, state_dim), jnp.float32)
    (mu2, sigma2), _ = recurrent_actor_prob_forward(
        s2, k_lstm_params, k_w_mu, b_mu, sigma_param)
    jax.block_until_ready((mu2, sigma2))
    mu2_ref, sigma2_ref = ref_forward(s2, lstm_params, w_mu, b_mu, sigma_param)
    assert jnp.allclose(mu2, mu2_ref, atol=tol, rtol=tol)
    assert jnp.allclose(sigma2, sigma2_ref, atol=tol, rtol=tol)

    print("KERNEL_OK")
</pallas_src>

<mosaic_0001>
module attributes {stable_mosaic.version = 11 : i64} {
  func.func @kernel(%arg0: memref<64x16xbf16, #tpu.memory_space<vmem>>, %arg1: memref<16x128xbf16, #tpu.memory_space<vmem>>, %arg2: memref<32x128xbf16, #tpu.memory_space<vmem>>, %arg3: memref<1x128xf32, #tpu.memory_space<vmem>>, %arg4: memref<32x128xbf16, #tpu.memory_space<vmem>>, %arg5: memref<32x128xbf16, #tpu.memory_space<vmem>>, %arg6: memref<1x128xf32, #tpu.memory_space<vmem>>, %arg7: memref<32x4xbf16, #tpu.memory_space<vmem>>, %arg8: memref<1x4xf32, #tpu.memory_space<vmem>>, %arg9: memref<8x4xf32, #tpu.memory_space<vmem>>) attributes {dimension_semantics = [], scalar_prefetch = 0 : i64, scratch_operands = 0 : i64, tpu.core_type = #tpu.core_type<tc>} {
    %c0 = arith.constant 0 : index
    %c0_0 = arith.constant 0 : index
    %0 = vector.load %arg1[%c0, %c0_0] : memref<16x128xbf16, #tpu.memory_space<vmem>>, vector<16x128xbf16>
    %c0_1 = arith.constant 0 : index
    %c0_2 = arith.constant 0 : index
    %1 = vector.load %arg4[%c0_1, %c0_2] : memref<32x128xbf16, #tpu.memory_space<vmem>>, vector<32x128xbf16>
    %c0_3 = arith.constant 0 : index
    %c0_4 = arith.constant 0 : index
    %2 = vector.load %arg2[%c0_3, %c0_4] : memref<32x128xbf16, #tpu.memory_space<vmem>>, vector<32x128xbf16>
    %c0_5 = arith.constant 0 : index
    %c0_6 = arith.constant 0 : index
    %3 = vector.load %arg5[%c0_5, %c0_6] : memref<32x128xbf16, #tpu.memory_space<vmem>>, vector<32x128xbf16>
    %c0_7 = arith.constant 0 : index
    %c0_8 = arith.constant 0 : index
    %4 = vector.load %arg3[%c0_7, %c0_8] : memref<1x128xf32, #tpu.memory_space<vmem>>, vector<1x128xf32>
    %c0_9 = arith.constant 0 : index
    %c0_10 = arith.constant 0 : index
    %5 = vector.load %arg6[%c0_9, %c0_10] : memref<1x128xf32, #tpu.memory_space<vmem>>, vector<1x128xf32>
    %c0_11 = arith.constant 0 : index
    %c0_12 = arith.constant 0 : index
    %6 = vector.load %arg0[%c0_11, %c0_12] : memref<64x16xbf16, #tpu.memory_space<vmem>>, vector<64x16xbf16>
    %cst = arith.constant dense<0.000000e+00> : vector<64x128xf32>
    %7 = tpu.matmul %6, %0, %cst {dimension_numbers = #tpu.dot_dimension_numbers<[1], [0], [0], [1], [0, 0, 1, 1], [], []>} : vector<64x16xbf16>, vector<16x128xbf16>, vector<64x128xf32> -> vector<64x128xf32>
    %8 = vector.broadcast %4 : vector<1x128xf32> to vector<64x128xf32>
    %9 = arith.addf %7, %8 : vector<64x128xf32>
    %cst_13 = arith.constant 0.000000e+00 : f32
    %10 = vector.broadcast %cst_13 : f32 to vector<8x32xf32>
    %cst_14 = arith.constant 0.000000e+00 : f32
    %11 = vector.broadcast %cst_14 : f32 to vector<8x32xf32>
    %cst_15 = arith.constant 0.000000e+00 : f32
    %12 = vector.broadcast %cst_15 : f32 to vector<8x32xf32>
    %cst_16 = arith.constant 0.000000e+00 : f32
    %13 = vector.broadcast %cst_16 : f32 to vector<8x32xf32>
    %14 = vector.extract_strided_slice %9 {offsets = [0, 0], sizes = [8, 128], strides = [1, 1]} : vector<64x128xf32> to vector<8x128xf32>
    %15 = arith.truncf %10 : vector<8x32xf32> to vector<8x32xbf16>
    %cst_17 = arith.constant dense<0.000000e+00> : vector<8x128xf32>
    %16 = tpu.matmul %15, %2, %cst_17 {dimension_numbers = #tpu.dot_dimension_numbers<[1], [0], [0], [1], [0, 0, 1, 1], [], []>} : vector<8x32xbf16>, vector<32x128xbf16>, vector<8x128xf32> -> vector<8x128xf32>
    %17 = arith.addf %14, %16 : vector<8x128xf32>
    %18 = arith.negf %17 : vector<8x128xf32>
    %19 = math.exp %18 : vector<8x128xf32>
    %cst_18 = arith.constant 1.000000e+00 : f32
    %20 = vector.broadcast %cst_18 : f32 to vector<8x128xf32>
    %21 = arith.addf %20, %19 : vector<8x128xf32>
    %22 = arith.divf %20, %21 : vector<8x128xf32>
    %23 = vector.extract_strided_slice %22 {offsets = [0, 0], sizes = [8, 32], strides = [1, 1]} : vector<8x128xf32> to vector<8x32xf32>
    %24 = vector.extract_strided_slice %22 {offsets = [0, 32], sizes = [8, 32], strides = [1, 1]} : vector<8x128xf32> to vector<8x32xf32>
    %25 = vector.extract_strided_slice %22 {offsets = [0, 64], sizes = [8, 32], strides = [1, 1]} : vector<8x128xf32> to vector<8x32xf32>
    %cst_19 = arith.constant 2.000000e+00 : f32
    %26 = vector.broadcast %cst_19 : f32 to vector<8x32xf32>
    %27 = arith.mulf %26, %25 : vector<8x32xf32>
    %cst_20 = arith.constant 1.000000e+00 : f32
    %28 = vector.broadcast %cst_20 : f32 to vector<8x32xf32>
    %29 = arith.subf %27, %28 : vector<8x32xf32>
    %30 = vector.extract_strided_slice %22 {offsets = [0, 96], sizes = [8, 32], strides = [1, 1]} : vector<8x128xf32> to vector<8x32xf32>
    %31 = arith.mulf %24, %12 : vector<8x32xf32>
    %32 = arith.mulf %23, %29 : vector<8x32xf32>
    %33 = arith.addf %31, %32 : vector<8x32xf32>
    %34 = math.tanh %33 : vector<8x32xf32>
    %35 = arith.mulf %30, %34 : vector<8x32xf32>
    %36 = vector.extract_strided_slice %9 {offsets = [8, 0], sizes = [8, 128], strides = [1, 1]} : vector<64x128xf32> to vector<8x128xf32>
    %37 = arith.truncf %35 : vector<8x32xf32> to vector<8x32xbf16>
    %cst_21 = arith.constant dense<0.000000e+00> : vector<8x128xf32>
    %38 = tpu.matmul %37, %2, %cst_21 {dimension_numbers = #tpu.dot_dimension_numbers<[1], [0], [0], [1], [0, 0, 1, 1], [], []>} : vector<8x32xbf16>, vector<32x128xbf16>, vector<8x128xf32> -> vector<8x128xf32>
    %39 = arith.addf %36, %38 : vector<8x128xf32>
    %40 = arith.negf %39 : vector<8x128xf32>
    %41 = math.exp %40 : vector<8x128xf32>
    %cst_22 = arith.constant 1.000000e+00 : f32
    %42 = vector.broadcast %cst_22 : f32 to vector<8x128xf32>
    %43 = arith.addf %42, %41 : vector<8x128xf32>
    %44 = arith.divf %42, %43 : vector<8x128xf32>
    %45 = vector.extract_strided_slice %44 {offsets = [0, 0], sizes = [8, 32], strides = [1, 1]} : vector<8x128xf32> to vector<8x32xf32>
    %46 = vector.extract_strided_slice %44 {offsets = [0, 32], sizes = [8, 32], strides = [1, 1]} : vector<8x128xf32> to vector<8x32xf32>
    %47 = vector.extract_strided_slice %44 {offsets = [0, 64], sizes = [8, 32], strides = [1, 1]} : vector<8x128xf32> to vector<8x32xf32>
    %cst_23 = arith.constant 2.000000e+00 : f32
    %48 = vector.broadcast %cst_23 : f32 to vector<8x32xf32>
    %49 = arith.mulf %48, %47 : vector<8x32xf32>
    %cst_24 = arith.constant 1.000000e+00 : f32
    %50 = vector.broadcast %cst_24 : f32 to vector<8x32xf32>
    %51 = arith.subf %49, %50 : vector<8x32xf32>
    %52 = vector.extract_strided_slice %44 {offsets = [0, 96], sizes = [8, 32], strides = [1, 1]} : vector<8x128xf32> to vector<8x32xf32>
    %53 = arith.mulf %46, %33 : vector<8x32xf32>
    %54 = arith.mulf %45, %51 : vector<8x32xf32>
    %55 = arith.addf %53, %54 : vector<8x32xf32>
    %56 = math.tanh %55 : vector<8x32xf32>
    %57 = arith.mulf %52, %56 : vector<8x32xf32>
    %58 = arith.truncf %35 : vector<8x32xf32> to vector<8x32xbf16>
    %cst_25 = arith.constant dense<0.000000e+00> : vector<8x128xf32>
    %59 = tpu.matmul %58, %1, %cst_25 {dimension_numbers = #tpu.dot_dimension_numbers<[1], [0], [0], [1], [0, 0, 1, 1], [], []>} : vector<8x32xbf16>, vector<32x128xbf16>, vector<8x128xf32> -> vector<8x128xf32>
    %60 = vector.broadcast %5 : vector<1x128xf32> to vector<8x128xf32>
    %61 = arith.addf %59, %60 : vector<8x128xf32>
    %62 = arith.truncf %11 : vector<8x32xf32> to vector<8x32xbf16>
    %cst_26 = arith.constant dense<0.000000e+00> : vector<8x128xf32>
    %63 = tpu.matmul %62, %3, %cst_26 {dimension_numbers = #tpu.dot_dimension_numbers<[1], [0], [0], [1], [0, 0, 1, 1], [], []>} : vector<8x32xbf16>, vector<32x128xbf16>, vector<8x128xf32> -> vector<8x128xf32>
    %64 = arith.addf %61, %63 : vector<8x128xf32>
    %65 = arith.negf %64 : vector<8x128xf32>
    %66 = math.exp %65 : vector<8x128xf32>
    %cst_27 = arith.constant 1.000000e+00 : f32
    %67 = vector.broadcast %cst_27 : f32 to vector<8x128xf32>
    %68 = arith.addf %67, %66 : vector<8x128xf32>
    %69 = arith.divf %67, %68 : vector<8x128xf32>
    %70 = vector.extract_strided_slice %69 {offsets = [0, 0], sizes = [8, 32], strides = [1, 1]} : vector<8x128xf32> to vector<8x32xf32>
    %71 = vector.extract_strided_slice %69 {offsets = [0, 32], sizes = [8, 32], strides = [1, 1]} : vector<8x128xf32> to vector<8x32xf32>
    %72 = vector.extract_strided_slice %69 {offsets = [0, 64], sizes = [8, 32], strides = [1, 1]} : vector<8x128xf32> to vector<8x32xf32>
    %cst_28 = arith.constant 2.000000e+00 : f32
    %73 = vector.broadcast %cst_28 : f32 to vector<8x32xf32>
    %74 = arith.mulf %73, %72 : vector<8x32xf32>
    %cst_29 = arith.constant 1.000000e+00 : f32
    %75 = vector.broadcast %cst_29 : f32 to vector<8x32xf32>
    %76 = arith.subf %74, %75 : vector<8x32xf32>
    %77 = vector.extract_strided_slice %69 {offsets = [0, 96], sizes = [8, 32], strides = [1, 1]} : vector<8x128xf32> to vector<8x32xf32>
    %78 = arith.mulf %71, %13 : vector<8x32xf32>
    %79 = arith.mulf %70, %76 : vector<8x32xf32>
    %80 = arith.addf %78, %79 : vector<8x32xf32>
    %81 = math.tanh %80 : vector<8x32xf32>
    %82 = arith.mulf %77, %81 : vector<8x32xf32>
    %83 = vector.extract_strided_slice %9 {offsets = [16, 0], sizes = [8, 128], strides = [1, 1]} : vector<64x128xf32> to vector<8x128xf32>
    %84 = arith.truncf %57 : vector<8x32xf32> to vector<8x32xbf16>
    %cst_30 = arith.constant dense<0.000000e+00> : vector<8x128xf32>
    %85 = tpu.matmul %84, %2, %cst_30 {dimension_numbers = #tpu.dot_dimension_numbers<[1], [0], [0], [1], [0, 0, 1, 1], [], []>} : vector<8x32xbf16>, vector<32x128xbf16>, vector<8x128xf32> -> vector<8x128xf32>
    %86 = arith.addf %83, %85 : vector<8x128xf32>
    %87 = arith.negf %86 : vector<8x128xf32>
    %88 = math.exp %87 : vector<8x128xf32>
    %cst_31 = arith.constant 1.000000e+00 : f32
    %89 = vector.broadcast %cst_31 : f32 to vector<8x128xf32>
    %90 = arith.addf %89, %88 : vector<8x128xf32>
    %91 = arith.divf %89, %90 : vector<8x128xf32>
    %92 = vector.extract_strided_slice %91 {offsets = [0, 0], sizes = [8, 32], strides = [1, 1]} : vector<8x128xf32> to vector<8x32xf32>
    %93 = vector.extract_strided_slice %91 {offsets = [0, 32], sizes = [8, 32], strides = [1, 1]} : vector<8x128xf32> to vector<8x32xf32>
    %94 = vector.extract_strided_slice %91 {offsets = [0, 64], sizes = [8, 32], strides = [1, 1]} : vector<8x128xf32> to vector<8x32xf32>
    %cst_32 = arith.constant 2.000000e+00 : f32
    %95 = vector.broadcast %cst_32 : f32 to vector<8x32xf32>
    %96 = arith.mulf %95, %94 : vector<8x32xf32>
    %cst_33 = arith.constant 1.000000e+00 : f32
    %97 = vector.broadcast %cst_33 : f32 to vector<8x32xf32>
    %98 = arith.subf %96, %97 : vector<8x32xf32>
    %99 = vector.extract_strided_slice %91 {offsets = [0, 96], sizes = [8, 32], strides = [1, 1]} : vector<8x128xf32> to vector<8x32xf32>
    %100 = arith.mulf %93, %55 : vector<8x32xf32>
    %101 = arith.mulf %92, %98 : vector<8x32xf32>
    %102 = arith.addf %100, %101 : vector<8x32xf32>
    %103 = math.tanh %102 : vector<8x32xf32>
    %104 = arith.mulf %99, %103 : vector<8x32xf32>
    %105 = arith.truncf %57 : vector<8x32xf32> to vector<8x32xbf16>
    %cst_34 = arith.constant dense<0.000000e+00> : vector<8x128xf32>
    %106 = tpu.matmul %105, %1, %cst_34 {dimension_numbers = #tpu.dot_dimension_numbers<[1], [0], [0], [1], [0, 0, 1, 1], [], []>} : vector<8x32xbf16>, vector<32x128xbf16>, vector<8x128xf32> -> vector<8x128xf32>
    %107 = vector.broadcast %5 : vector<1x128xf32> to vector<8x128xf32>
    %108 = arith.addf %106, %107 : vector<8x128xf32>
    %109 = arith.truncf %82 : vector<8x32xf32> to vector<8x32xbf16>
    %cst_35 = arith.constant dense<0.000000e+00> : vector<8x128xf32>
    %110 = tpu.matmul %109, %3, %cst_35 {dimension_numbers = #tpu.dot_dimension_numbers<[1], [0], [0], [1], [0, 0, 1, 1], [], []>} : vector<8x32xbf16>, vector<32x128xbf16>, vector<8x128xf32> -> vector<8x128xf32>
    %111 = arith.addf %108, %110 : vector<8x128xf32>
    %112 = arith.negf %111 : vector<8x128xf32>
    %113 = math.exp %112 : vector<8x128xf32>
    %cst_36 = arith.constant 1.000000e+00 : f32
    %114 = vector.broadcast %cst_36 : f32 to vector<8x128xf32>
    %115 = arith.addf %114, %113 : vector<8x128xf32>
    %116 = arith.divf %114, %115 : vector<8x128xf32>
    %117 = vector.extract_strided_slice %116 {offsets = [0, 0], sizes = [8, 32], strides = [1, 1]} : vector<8x128xf32> to vector<8x32xf32>
    %118 = vector.extract_strided_slice %116 {offsets = [0, 32], sizes = [8, 32], strides = [1, 1]} : vector<8x128xf32> to vector<8x32xf32>
    %119 = vector.extract_strided_slice %116 {offsets = [0, 64], sizes = [8, 32], strides = [1, 1]} : vector<8x128xf32> to vector<8x32xf32>
    %cst_37 = arith.constant 2.000000e+00 : f32
    %120 = vector.broadcast %cst_37 : f32 to vector<8x32xf32>
    %121 = arith.mulf %120, %119 : vector<8x32xf32>
    %cst_38 = arith.constant 1.000000e+00 : f32
    %122 = vector.broadcast %cst_38 : f32 to vector<8x32xf32>
    %123 = arith.subf %121, %122 : vector<8x32xf32>
    %124 = vector.extract_strided_slice %116 {offsets = [0, 96], sizes = [8, 32], strides = [1, 1]} : vector<8x128xf32> to vector<8x32xf32>
    %125 = arith.mulf %118, %80 : vector<8x32xf32>
    %126 = arith.mulf %117, %123 : vector<8x32xf32>
    %127 = arith.addf %125, %126 : vector<8x32xf32>
    %128 = math.tanh %127 : vector<8x32xf32>
    %129 = arith.mulf %124, %128 : vector<8x32xf32>
    %130 = vector.extract_strided_slice %9 {offsets = [24, 0], sizes = [8, 128], strides = [1, 1]} : vector<64x128xf32> to vector<8x128xf32>
    %131 = arith.truncf %104 : vector<8x32xf32> to vector<8x32xbf16>
    %cst_39 = arith.constant dense<0.000000e+00> : vector<8x128xf32>
    %132 = tpu.matmul %131, %2, %cst_39 {dimension_numbers = #tpu.dot_dimension_numbers<[1], [0], [0], [1], [0, 0, 1, 1], [], []>} : vector<8x32xbf16>, vector<32x128xbf16>, vector<8x128xf32> -> vector<8x128xf32>
    %133 = arith.addf %130, %132 : vector<8x128xf32>
    %134 = arith.negf %133 : vector<8x128xf32>
    %135 = math.exp %134 : vector<8x128xf32>
    %cst_40 = arith.constant 1.000000e+00 : f32
    %136 = vector.broadcast %cst_40 : f32 to vector<8x128xf32>
    %137 = arith.addf %136, %135 : vector<8x128xf32>
    %138 = arith.divf %136, %137 : vector<8x128xf32>
    %139 = vector.extract_strided_slice %138 {offsets = [0, 0], sizes = [8, 32], strides = [1, 1]} : vector<8x128xf32> to vector<8x32xf32>
    %140 = vector.extract_strided_slice %138 {offsets = [0, 32], sizes = [8, 32], strides = [1, 1]} : vector<8x128xf32> to vector<8x32xf32>
    %141 = vector.extract_strided_slice %138 {offsets = [0, 64], sizes = [8, 32], strides = [1, 1]} : vector<8x128xf32> to vector<8x32xf32>
    %cst_41 = arith.constant 2.000000e+00 : f32
    %142 = vector.broadcast %cst_41 : f32 to vector<8x32xf32>
    %143 = arith.mulf %142, %141 : vector<8x32xf32>
    %cst_42 = arith.constant 1.000000e+00 : f32
    %144 = vector.broadcast %cst_42 : f32 to vector<8x32xf32>
    %145 = arith.subf %143, %144 : vector<8x32xf32>
    %146 = vector.extract_strided_slice %138 {offsets = [0, 96], sizes = [8, 32], strides = [1, 1]} : vector<8x128xf32> to vector<8x32xf32>
    %147 = arith.mulf %140, %102 : vector<8x32xf32>
    %148 = arith.mulf %139, %145 : vector<8x32xf32>
    %149 = arith.addf %147, %148 : vector<8x32xf32>
    %150 = math.tanh %149 : vector<8x32xf32>
    %151 = arith.mulf %146, %150 : vector<8x32xf32>
    %152 = arith.truncf %104 : vector<8x32xf32> to vector<8x32xbf16>
    %cst_43 = arith.constant dense<0.000000e+00> : vector<8x128xf32>
    %153 = tpu.matmul %152, %1, %cst_43 {dimension_numbers = #tpu.dot_dimension_numbers<[1], [0], [0], [1], [0, 0, 1, 1], [], []>} : vector<8x32xbf16>, vector<32x128xbf16>, vector<8x128xf32> -> vector<8x128xf32>
    %154 = vector.broadcast %5 : vector<1x128xf32> to vector<8x128xf32>
    %155 = arith.addf %153, %154 : vector<8x128xf32>
    %156 = arith.truncf %129 : vector<8x32xf32> to vector<8x32xbf16>
    %cst_44 = arith.constant dense<0.000000e+00> : vector<8x128xf32>
    %157 = tpu.matmul %156, %3, %cst_44 {dimension_numbers = #tpu.dot_dimension_numbers<[1], [0], [0], [1], [0, 0, 1, 1], [], []>} : vector<8x32xbf16>, vector<32x128xbf16>, vector<8x128xf32> -> vector<8x128xf32>
    %158 = arith.addf %155, %157 : vector<8x128xf32>
    %159 = arith.negf %158 : vector<8x128xf32>
    %160 = math.exp %159 : vector<8x128xf32>
    %cst_45 = arith.constant 1.000000e+00 : f32
    %161 = vector.broadcast %cst_45 : f32 to vector<8x128xf32>
    %162 = arith.addf %161, %160 : vector<8x128xf32>
    %163 = arith.divf %161, %162 : vector<8x128xf32>
    %164 = vector.extract_strided_slice %163 {offsets = [0, 0], sizes = [8, 32], strides = [1, 1]} : vector<8x128xf32> to vector<8x32xf32>
    %165 = vector.extract_strided_slice %163 {offsets = [0, 32], sizes = [8, 32], strides = [1, 1]} : vector<8x128xf32> to vector<8x32xf32>
    %166 = vector.extract_strided_slice %163 {offsets = [0, 64], sizes = [8, 32], strides = [1, 1]} : vector<8x128xf32> to vector<8x32xf32>
    %cst_46 = arith.constant 2.000000e+00 : f32
    %167 = vector.broadcast %cst_46 : f32 to vector<8x32xf32>
    %168 = arith.mulf %167, %166 : vector<8x32xf32>
    %cst_47 = arith.constant 1.000000e+00 : f32
    %169 = vector.broadcast %cst_47 : f32 to vector<8x32xf32>
    %170 = arith.subf %168, %169 : vector<8x32xf32>
    %171 = vector.extract_strided_slice %163 {offsets = [0, 96], sizes = [8, 32], strides = [1, 1]} : vector<8x128xf32> to vector<8x32xf32>
    %172 = arith.mulf %165, %127 : vector<8x32xf32>
    %173 = arith.mulf %164, %170 : vector<8x32xf32>
    %174 = arith.addf %172, %173 : vector<8x32xf32>
    %175 = math.tanh %174 : vector<8x32xf32>
    %176 = arith.mulf %171, %175 : vector<8x32xf32>
    %177 = vector.extract_strided_slice %9 {offsets = [32, 0], sizes = [8, 128], strides = [1, 1]} : vector<64x128xf32> to vector<8x128xf32>
    %178 = arith.truncf %151 : vector<8x32xf32> to vector<8x32xbf16>
    %cst_48 = arith.constant dense<0.000000e+00> : vector<8x128xf32>
    %179 = tpu.matmul %178, %2, %cst_48 {dimension_numbers = #tpu.dot_dimension_numbers<[1], [0], [0], [1], [0, 0, 1, 1], [], []>} : vector<8x32xbf16>, vector<32x128xbf16>, vector<8x128xf32> -> vector<8x128xf32>
    %180 = arith.addf %177, %179 : vector<8x128xf32>
    %181 = arith.negf %180 : vector<8x128xf32>
    %182 = math.exp %181 : vector<8x128xf32>
    %cst_49 = arith.constant 1.000000e+00 : f32
    %183 = vector.broadcast %cst_49 : f32 to vector<8x128xf32>
    %184 = arith.addf %183, %182 : vector<8x128xf32>
    %185 = arith.divf %183, %184 : vector<8x128xf32>
    %186 = vector.extract_strided_slice %185 {offsets = [0, 0], sizes = [8, 32], strides = [1, 1]} : vector<8x128xf32> to vector<8x32xf32>
    %187 = vector.extract_strided_slice %185 {offsets = [0, 32], sizes = [8, 32], strides = [1, 1]} : vector<8x128xf32> to vector<8x32xf32>
    %188 = vector.extract_strided_slice %185 {offsets = [0, 64], sizes = [8, 32], strides = [1, 1]} : vector<8x128xf32> to vector<8x32xf32>
    %cst_50 = arith.constant 2.000000e+00 : f32
    %189 = vector.broadcast %cst_50 : f32 to vector<8x32xf32>
    %190 = arith.mulf %189, %188 : vector<8x32xf32>
    %cst_51 = arith.constant 1.000000e+00 : f32
    %191 = vector.broadcast %cst_51 : f32 to vector<8x32xf32>
    %192 = arith.subf %190, %191 : vector<8x32xf32>
    %193 = vector.extract_strided_slice %185 {offsets = [0, 96], sizes = [8, 32], strides = [1, 1]} : vector<8x128xf32> to vector<8x32xf32>
    %194 = arith.mulf %187, %149 : vector<8x32xf32>
    %195 = arith.mulf %186, %192 : vector<8x32xf32>
    %196 = arith.addf %194, %195 : vector<8x32xf32>
    %197 = math.tanh %196 : vector<8x32xf32>
    %198 = arith.mulf %193, %197 : vector<8x32xf32>
    %199 = arith.truncf %151 : vector<8x32xf32> to vector<8x32xbf16>
    %cst_52 = arith.constant dense<0.000000e+00> : vector<8x128xf32>
    %200 = tpu.matmul %199, %1, %cst_52 {dimension_numbers = #tpu.dot_dimension_numbers<[1], [0], [0], [1], [0, 0, 1, 1], [], []>} : vector<8x32xbf16>, vector<32x128xbf16>, vector<8x128xf32> -> vector<8x128xf32>
    %201 = vector.broadcast %5 : vector<1x128xf32> to vector<8x128xf32>
    %202 = arith.addf %200, %201 : vector<8x128xf32>
    %203 = arith.truncf %176 : vector<8x32xf32> to vector<8x32xbf16>
    %cst_53 = arith.constant dense<0.000000e+00> : vector<8x128xf32>
    %204 = tpu.matmul %203, %3, %cst_53 {dimension_numbers = #tpu.dot_dimension_numbers<[1], [0], [0], [1], [0, 0, 1, 1], [], []>} : vector<8x32xbf16>, vector<32x128xbf16>, vector<8x128xf32> -> vector<8x128xf32>
    %205 = arith.addf %202, %204 : vector<8x128xf32>
    %206 = arith.negf %205 : vector<8x128xf32>
    %207 = math.exp %206 : vector<8x128xf32>
    %cst_54 = arith.constant 1.000000e+00 : f32
    %208 = vector.broadcast %cst_54 : f32 to vector<8x128xf32>
    %209 = arith.addf %208, %207 : vector<8x128xf32>
    %210 = arith.divf %208, %209 : vector<8x128xf32>
    %211 = vector.extract_strided_slice %210 {offsets = [0, 0], sizes = [8, 32], strides = [1, 1]} : vector<8x128xf32> to vector<8x32xf32>
    %212 = vector.extract_strided_slice %210 {offsets = [0, 32], sizes = [8, 32], strides = [1, 1]} : vector<8x128xf32> to vector<8x32xf32>
    %213 = vector.extract_strided_slice %210 {offsets = [0, 64], sizes = [8, 32], strides = [1, 1]} : vector<8x128xf32> to vector<8x32xf32>
    %cst_55 = arith.constant 2.000000e+00 : f32
    %214 = vector.broadcast %cst_55 : f32 to vector<8x32xf32>
    %215 = arith.mulf %214, %213 : vector<8x32xf32>
    %cst_56 = arith.constant 1.000000e+00 : f32
    %216 = vector.broadcast %cst_56 : f32 to vector<8x32xf32>
    %217 = arith.subf %215, %216 : vector<8x32xf32>
    %218 = vector.extract_strided_slice %210 {offsets = [0, 96], sizes = [8, 32], strides = [1, 1]} : vector<8x128xf32> to vector<8x32xf32>
    %219 = arith.mulf %212, %174 : vector<8x32xf32>
    %220 = arith.mulf %211, %217 : vector<8x32xf32>
    %221 = arith.addf %219, %220 : vector<8x32xf32>
    %222 = math.tanh %221 : vector<8x32xf32>
    %223 = arith.mulf %218, %222 : vector<8x32xf32>
    %224 = vector.extract_strided_slice %9 {offsets = [40, 0], sizes = [8, 128], strides = [1, 1]} : vector<64x128xf32> to vector<8x128xf32>
    %225 = arith.truncf %198 : vector<8x32xf32> to vector<8x32xbf16>
    %cst_57 = arith.constant dense<0.000000e+00> : vector<8x128xf32>
    %226 = tpu.matmul %225, %2, %cst_57 {dimension_numbers = #tpu.dot_dimension_numbers<[1], [0], [0], [1], [0, 0, 1, 1], [], []>} : vector<8x32xbf16>, vector<32x128xbf16>, vector<8x128xf32> -> vector<8x128xf32>
    %227 = arith.addf %224, %226 : vector<8x128xf32>
    %228 = arith.negf %227 : vector<8x128xf32>
    %229 = math.exp %228 : vector<8x128xf32>
    %cst_58 = arith.constant 1.000000e+00 : f32
    %230 = vector.broadcast %cst_58 : f32 to vector<8x128xf32>
    %231 = arith.addf %230, %229 : vector<8x128xf32>
    %232 = arith.divf %230, %231 : vector<8x128xf32>
    %233 = vector.extract_strided_slice %232 {offsets = [0, 0], sizes = [8, 32], strides = [1, 1]} : vector<8x128xf32> to vector<8x32xf32>
    %234 = vector.extract_strided_slice %232 {offsets = [0, 32], sizes = [8, 32], strides = [1, 1]} : vector<8x128xf32> to vector<8x32xf32>
    %235 = vector.extract_strided_slice %232 {offsets = [0, 64], sizes = [8, 32], strides = [1, 1]} : vector<8x128xf32> to vector<8x32xf32>
    %cst_59 = arith.constant 2.000000e+00 : f32
    %236 = vector.broadcast %cst_59 : f32 to vector<8x32xf32>
    %237 = arith.mulf %236, %235 : vector<8x32xf32>
    %cst_60 = arith.constant 1.000000e+00 : f32
    %238 = vector.broadcast %cst_60 : f32 to vector<8x32xf32>
    %239 = arith.subf %237, %238 : vector<8x32xf32>
    %240 = vector.extract_strided_slice %232 {offsets = [0, 96], sizes = [8, 32], strides = [1, 1]} : vector<8x128xf32> to vector<8x32xf32>
    %241 = arith.mulf %234, %196 : vector<8x32xf32>
    %242 = arith.mulf %233, %239 : vector<8x32xf32>
    %243 = arith.addf %241, %242 : vector<8x32xf32>
    %244 = math.tanh %243 : vector<8x32xf32>
    %245 = arith.mulf %240, %244 : vector<8x32xf32>
    %246 = arith.truncf %198 : vector<8x32xf32> to vector<8x32xbf16>
    %cst_61 = arith.constant dense<0.000000e+00> : vector<8x128xf32>
    %247 = tpu.matmul %246, %1, %cst_61 {dimension_numbers = #tpu.dot_dimension_numbers<[1], [0], [0], [1], [0, 0, 1, 1], [], []>} : vector<8x32xbf16>, vector<32x128xbf16>, vector<8x128xf32> -> vector<8x128xf32>
    %248 = vector.broadcast %5 : vector<1x128xf32> to vector<8x128xf32>
    %249 = arith.addf %247, %248 : vector<8x128xf32>
    %250 = arith.truncf %223 : vector<8x32xf32> to vector<8x32xbf16>
    %cst_62 = arith.constant dense<0.000000e+00> : vector<8x128xf32>
    %251 = tpu.matmul %250, %3, %cst_62 {dimension_numbers = #tpu.dot_dimension_numbers<[1], [0], [0], [1], [0, 0, 1, 1], [], []>} : vector<8x32xbf16>, vector<32x128xbf16>, vector<8x128xf32> -> vector<8x128xf32>
    %252 = arith.addf %249, %251 : vector<8x128xf32>
    %253 = arith.negf %252 : vector<8x128xf32>
    %254 = math.exp %253 : vector<8x128xf32>
    %cst_63 = arith.constant 1.000000e+00 : f32
    %255 = vector.broadcast %cst_63 : f32 to vector<8x128xf32>
    %256 = arith.addf %255, %254 : vector<8x128xf32>
    %257 = arith.divf %255, %256 : vector<8x128xf32>
    %258 = vector.extract_strided_slice %257 {offsets = [0, 0], sizes = [8, 32], strides = [1, 1]} : vector<8x128xf32> to vector<8x32xf32>
    %259 = vector.extract_strided_slice %257 {offsets = [0, 32], sizes = [8, 32], strides = [1, 1]} : vector<8x128xf32> to vector<8x32xf32>
    %260 = vector.extract_strided_slice %257 {offsets = [0, 64], sizes = [8, 32], strides = [1, 1]} : vector<8x128xf32> to vector<8x32xf32>
    %cst_64 = arith.constant 2.000000e+00 : f32
    %261 = vector.broadcast %cst_64 : f32 to vector<8x32xf32>
    %262 = arith.mulf %261, %260 : vector<8x32xf32>
    %cst_65 = arith.constant 1.000000e+00 : f32
    %263 = vector.broadcast %cst_65 : f32 to vector<8x32xf32>
    %264 = arith.subf %262, %263 : vector<8x32xf32>
    %265 = vector.extract_strided_slice %257 {offsets = [0, 96], sizes = [8, 32], strides = [1, 1]} : vector<8x128xf32> to vector<8x32xf32>
    %266 = arith.mulf %259, %221 : vector<8x32xf32>
    %267 = arith.mulf %258, %264 : vector<8x32xf32>
    %268 = arith.addf %266, %267 : vector<8x32xf32>
    %269 = math.tanh %268 : vector<8x32xf32>
    %270 = arith.mulf %265, %269 : vector<8x32xf32>
    %271 = vector.extract_strided_slice %9 {offsets = [48, 0], sizes = [8, 128], strides = [1, 1]} : vector<64x128xf32> to vector<8x128xf32>
    %272 = arith.truncf %245 : vector<8x32xf32> to vector<8x32xbf16>
    %cst_66 = arith.constant dense<0.000000e+00> : vector<8x128xf32>
    %273 = tpu.matmul %272, %2, %cst_66 {dimension_numbers = #tpu.dot_dimension_numbers<[1], [0], [0], [1], [0, 0, 1, 1], [], []>} : vector<8x32xbf16>, vector<32x128xbf16>, vector<8x128xf32> -> vector<8x128xf32>
    %274 = arith.addf %271, %273 : vector<8x128xf32>
    %275 = arith.negf %274 : vector<8x128xf32>
    %276 = math.exp %275 : vector<8x128xf32>
    %cst_67 = arith.constant 1.000000e+00 : f32
    %277 = vector.broadcast %cst_67 : f32 to vector<8x128xf32>
    %278 = arith.addf %277, %276 : vector<8x128xf32>
    %279 = arith.divf %277, %278 : vector<8x128xf32>
    %280 = vector.extract_strided_slice %279 {offsets = [0, 0], sizes = [8, 32], strides = [1, 1]} : vector<8x128xf32> to vector<8x32xf32>
    %281 = vector.extract_strided_slice %279 {offsets = [0, 32], sizes = [8, 32], strides = [1, 1]} : vector<8x128xf32> to vector<8x32xf32>
    %282 = vector.extract_strided_slice %279 {offsets = [0, 64], sizes = [8, 32], strides = [1, 1]} : vector<8x128xf32> to vector<8x32xf32>
    %cst_68 = arith.constant 2.000000e+00 : f32
    %283 = vector.broadcast %cst_68 : f32 to vector<8x32xf32>
    %284 = arith.mulf %283, %282 : vector<8x32xf32>
    %cst_69 = arith.constant 1.000000e+00 : f32
    %285 = vector.broadcast %cst_69 : f32 to vector<8x32xf32>
    %286 = arith.subf %284, %285 : vector<8x32xf32>
    %287 = vector.extract_strided_slice %279 {offsets = [0, 96], sizes = [8, 32], strides = [1, 1]} : vector<8x128xf32> to vector<8x32xf32>
    %288 = arith.mulf %281, %243 : vector<8x32xf32>
    %289 = arith.mulf %280, %286 : vector<8x32xf32>
    %290 = arith.addf %288, %289 : vector<8x32xf32>
    %291 = math.tanh %290 : vector<8x32xf32>
    %292 = arith.mulf %287, %291 : vector<8x32xf32>
    %293 = arith.truncf %245 : vector<8x32xf32> to vector<8x32xbf16>
    %cst_70 = arith.constant dense<0.000000e+00> : vector<8x128xf32>
    %294 = tpu.matmul %293, %1, %cst_70 {dimension_numbers = #tpu.dot_dimension_numbers<[1], [0], [0], [1], [0, 0, 1, 1], [], []>} : vector<8x32xbf16>, vector<32x128xbf16>, vector<8x128xf32> -> vector<8x128xf32>
    %295 = vector.broadcast %5 : vector<1x128xf32> to vector<8x128xf32>
    %296 = arith.addf %294, %295 : vector<8x128xf32>
    %297 = arith.truncf %270 : vector<8x32xf32> to vector<8x32xbf16>
    %cst_71 = arith.constant dense<0.000000e+00> : vector<8x128xf32>
    %298 = tpu.matmul %297, %3, %cst_71 {dimension_numbers = #tpu.dot_dimension_numbers<[1], [0], [0], [1], [0, 0, 1, 1], [], []>} : vector<8x32xbf16>, vector<32x128xbf16>, vector<8x128xf32> -> vector<8x128xf32>
    %299 = arith.addf %296, %298 : vector<8x128xf32>
    %300 = arith.negf %299 : vector<8x128xf32>
    %301 = math.exp %300 : vector<8x128xf32>
    %cst_72 = arith.constant 1.000000e+00 : f32
    %302 = vector.broadcast %cst_72 : f32 to vector<8x128xf32>
    %303 = arith.addf %302, %301 : vector<8x128xf32>
    %304 = arith.divf %302, %303 : vector<8x128xf32>
    %305 = vector.extract_strided_slice %304 {offsets = [0, 0], sizes = [8, 32], strides = [1, 1]} : vector<8x128xf32> to vector<8x32xf32>
    %306 = vector.extract_strided_slice %304 {offsets = [0, 32], sizes = [8, 32], strides = [1, 1]} : vector<8x128xf32> to vector<8x32xf32>
    %307 = vector.extract_strided_slice %304 {offsets = [0, 64], sizes = [8, 32], strides = [1, 1]} : vector<8x128xf32> to vector<8x32xf32>
    %cst_73 = arith.constant 2.000000e+00 : f32
    %308 = vector.broadcast %cst_73 : f32 to vector<8x32xf32>
    %309 = arith.mulf %308, %307 : vector<8x32xf32>
    %cst_74 = arith.constant 1.000000e+00 : f32
    %310 = vector.broadcast %cst_74 : f32 to vector<8x32xf32>
    %311 = arith.subf %309, %310 : vector<8x32xf32>
    %312 = vector.extract_strided_slice %304 {offsets = [0, 96], sizes = [8, 32], strides = [1, 1]} : vector<8x128xf32> to vector<8x32xf32>
    %313 = arith.mulf %306, %268 : vector<8x32xf32>
    %314 = arith.mulf %305, %311 : vector<8x32xf32>
    %315 = arith.addf %313, %314 : vector<8x32xf32>
    %316 = math.tanh %315 : vector<8x32xf32>
    %317 = arith.mulf %312, %316 : vector<8x32xf32>
    %318 = vector.extract_strided_slice %9 {offsets = [56, 0], sizes = [8, 128], strides = [1, 1]} : vector<64x128xf32> to vector<8x128xf32>
    %319 = arith.truncf %292 : vector<8x32xf32> to vector<8x32xbf16>
    %cst_75 = arith.constant dense<0.000000e+00> : vector<8x128xf32>
    %320 = tpu.matmul %319, %2, %cst_75 {dimension_numbers = #tpu.dot_dimension_numbers<[1], [0], [0], [1], [0, 0, 1, 1], [], []>} : vector<8x32xbf16>, vector<32x128xbf16>, vector<8x128xf32> -> vector<8x128xf32>
    %321 = arith.addf %318, %320 : vector<8x128xf32>
    %322 = arith.negf %321 : vector<8x128xf32>
    %323 = math.exp %322 : vector<8x128xf32>
    %cst_76 = arith.constant 1.000000e+00 : f32
    %324 = vector.broadcast %cst_76 : f32 to vector<8x128xf32>
    %325 = arith.addf %324, %323 : vector<8x128xf32>
    %326 = arith.divf %324, %325 : vector<8x128xf32>
    %327 = vector.extract_strided_slice %326 {offsets = [0, 0], sizes = [8, 32], strides = [1, 1]} : vector<8x128xf32> to vector<8x32xf32>
    %328 = vector.extract_strided_slice %326 {offsets = [0, 32], sizes = [8, 32], strides = [1, 1]} : vector<8x128xf32> to vector<8x32xf32>
    %329 = vector.extract_strided_slice %326 {offsets = [0, 64], sizes = [8, 32], strides = [1, 1]} : vector<8x128xf32> to vector<8x32xf32>
    %cst_77 = arith.constant 2.000000e+00 : f32
    %330 = vector.broadcast %cst_77 : f32 to vector<8x32xf32>
    %331 = arith.mulf %330, %329 : vector<8x32xf32>
    %cst_78 = arith.constant 1.000000e+00 : f32
    %332 = vector.broadcast %cst_78 : f32 to vector<8x32xf32>
    %333 = arith.subf %331, %332 : vector<8x32xf32>
    %334 = vector.extract_strided_slice %326 {offsets = [0, 96], sizes = [8, 32], strides = [1, 1]} : vector<8x128xf32> to vector<8x32xf32>
    %335 = arith.mulf %328, %290 : vector<8x32xf32>
    %336 = arith.mulf %327, %333 : vector<8x32xf32>
    %337 = arith.addf %335, %336 : vector<8x32xf32>
    %338 = math.tanh %337 : vector<8x32xf32>
    %339 = arith.mulf %334, %338 : vector<8x32xf32>
    %340 = arith.truncf %292 : vector<8x32xf32> to vector<8x32xbf16>
    %cst_79 = arith.constant dense<0.000000e+00> : vector<8x128xf32>
    %341 = tpu.matmul %340, %1, %cst_79 {dimension_numbers = #tpu.dot_dimension_numbers<[1], [0], [0], [1], [0, 0, 1, 1], [], []>} : vector<8x32xbf16>, vector<32x128xbf16>, vector<8x128xf32> -> vector<8x128xf32>
    %342 = vector.broadcast %5 : vector<1x128xf32> to vector<8x128xf32>
    %343 = arith.addf %341, %342 : vector<8x128xf32>
    %344 = arith.truncf %317 : vector<8x32xf32> to vector<8x32xbf16>
    %cst_80 = arith.constant dense<0.000000e+00> : vector<8x128xf32>
    %345 = tpu.matmul %344, %3, %cst_80 {dimension_numbers = #tpu.dot_dimension_numbers<[1], [0], [0], [1], [0, 0, 1, 1], [], []>} : vector<8x32xbf16>, vector<32x128xbf16>, vector<8x128xf32> -> vector<8x128xf32>
    %346 = arith.addf %343, %345 : vector<8x128xf32>
    %347 = arith.negf %346 : vector<8x128xf32>
    %348 = math.exp %347 : vector<8x128xf32>
    %cst_81 = arith.constant 1.000000e+00 : f32
    %349 = vector.broadcast %cst_81 : f32 to vector<8x128xf32>
    %350 = arith.addf %349, %348 : vector<8x128xf32>
    %351 = arith.divf %349, %350 : vector<8x128xf32>
    %352 = vector.extract_strided_slice %351 {offsets = [0, 0], sizes = [8, 32], strides = [1, 1]} : vector<8x128xf32> to vector<8x32xf32>
    %353 = vector.extract_strided_slice %351 {offsets = [0, 32], sizes = [8, 32], strides = [1, 1]} : vector<8x128xf32> to vector<8x32xf32>
    %354 = vector.extract_strided_slice %351 {offsets = [0, 64], sizes = [8, 32], strides = [1, 1]} : vector<8x128xf32> to vector<8x32xf32>
    %cst_82 = arith.constant 2.000000e+00 : f32
    %355 = vector.broadcast %cst_82 : f32 to vector<8x32xf32>
    %356 = arith.mulf %355, %354 : vector<8x32xf32>
    %cst_83 = arith.constant 1.000000e+00 : f32
    %357 = vector.broadcast %cst_83 : f32 to vector<8x32xf32>
    %358 = arith.subf %356, %357 : vector<8x32xf32>
    %359 = vector.extract_strided_slice %351 {offsets = [0, 96], sizes = [8, 32], strides = [1, 1]} : vector<8x128xf32> to vector<8x32xf32>
    %360 = arith.mulf %353, %315 : vector<8x32xf32>
    %361 = arith.mulf %352, %358 : vector<8x32xf32>
    %362 = arith.addf %360, %361 : vector<8x32xf32>
    %363 = math.tanh %362 : vector<8x32xf32>
    %364 = arith.mulf %359, %363 : vector<8x32xf32>
    %365 = arith.truncf %339 : vector<8x32xf32> to vector<8x32xbf16>
    %cst_84 = arith.constant dense<0.000000e+00> : vector<8x128xf32>
    %366 = tpu.matmul %365, %1, %cst_84 {dimension_numbers = #tpu.dot_dimension_numbers<[1], [0], [0], [1], [0, 0, 1, 1], [], []>} : vector<8x32xbf16>, vector<32x128xbf16>, vector<8x128xf32> -> vector<8x128xf32>
    %367 = vector.broadcast %5 : vector<1x128xf32> to vector<8x128xf32>
    %368 = arith.addf %366, %367 : vector<8x128xf32>
    %369 = arith.truncf %364 : vector<8x32xf32> to vector<8x32xbf16>
    %cst_85 = arith.constant dense<0.000000e+00> : vector<8x128xf32>
    %370 = tpu.matmul %369, %3, %cst_85 {dimension_numbers = #tpu.dot_dimension_numbers<[1], [0], [0], [1], [0, 0, 1, 1], [], []>} : vector<8x32xbf16>, vector<32x128xbf16>, vector<8x128xf32> -> vector<8x128xf32>
    %371 = arith.addf %368, %370 : vector<8x128xf32>
    %372 = arith.negf %371 : vector<8x128xf32>
    %373 = math.exp %372 : vector<8x128xf32>
    %cst_86 = arith.constant 1.000000e+00 : f32
    %374 = vector.broadcast %cst_86 : f32 to vector<8x128xf32>
    %375 = arith.addf %374, %373 : vector<8x128xf32>
    %376 = arith.divf %374, %375 : vector<8x128xf32>
    %377 = vector.extract_strided_slice %376 {offsets = [0, 0], sizes = [8, 32], strides = [1, 1]} : vector<8x128xf32> to vector<8x32xf32>
    %378 = vector.extract_strided_slice %376 {offsets = [0, 32], sizes = [8, 32], strides = [1, 1]} : vector<8x128xf32> to vector<8x32xf32>
    %379 = vector.extract_strided_slice %376 {offsets = [0, 64], sizes = [8, 32], strides = [1, 1]} : vector<8x128xf32> to vector<8x32xf32>
    %cst_87 = arith.constant 2.000000e+00 : f32
    %380 = vector.broadcast %cst_87 : f32 to vector<8x32xf32>
    %381 = arith.mulf %380, %379 : vector<8x32xf32>
    %cst_88 = arith.constant 1.000000e+00 : f32
    %382 = vector.broadcast %cst_88 : f32 to vector<8x32xf32>
    %383 = arith.subf %381, %382 : vector<8x32xf32>
    %384 = vector.extract_strided_slice %376 {offsets = [0, 96], sizes = [8, 32], strides = [1, 1]} : vector<8x128xf32> to vector<8x32xf32>
    %385 = arith.mulf %378, %362 : vector<8x32xf32>
    %386 = arith.mulf %377, %383 : vector<8x32xf32>
    %387 = arith.addf %385, %386 : vector<8x32xf32>
    %388 = math.tanh %387 : vector<8x32xf32>
    %389 = arith.mulf %384, %388 : vector<8x32xf32>
    %390 = arith.truncf %389 : vector<8x32xf32> to vector<8x32xbf16>
    %c0_89 = arith.constant 0 : index
    %c0_90 = arith.constant 0 : index
    %391 = vector.load %arg7[%c0_89, %c0_90] : memref<32x4xbf16, #tpu.memory_space<vmem>>, vector<32x4xbf16>
    %cst_91 = arith.constant dense<0.000000e+00> : vector<8x4xf32>
    %392 = tpu.matmul %390, %391, %cst_91 {dimension_numbers = #tpu.dot_dimension_numbers<[1], [0], [0], [1], [0, 0, 1, 1], [], []>} : vector<8x32xbf16>, vector<32x4xbf16>, vector<8x4xf32> -> vector<8x4xf32>
    %c0_92 = arith.constant 0 : index
    %c0_93 = arith.constant 0 : index
    %393 = vector.load %arg8[%c0_92, %c0_93] : memref<1x4xf32, #tpu.memory_space<vmem>>, vector<1x4xf32>
    %394 = vector.broadcast %393 : vector<1x4xf32> to vector<8x4xf32>
    %395 = arith.addf %392, %394 : vector<8x4xf32>
    %c0_94 = arith.constant 0 : index
    %c0_95 = arith.constant 0 : index
    %396 = vector.load %arg9[%c0_94, %c0_95] : memref<8x4xf32, #tpu.memory_space<vmem>>, vector<8x4xf32>
    tpu.vector_store %arg9[%c0_94, %c0_95], %395 {strides = array<i32>} : memref<8x4xf32, #tpu.memory_space<vmem>>, vector<8x4xf32>,
    return
  }
}

</mosaic_0001>

<llo_original>
// kernel: recurrent_actor_prob_forward.1
$region0: #{recurrent_actor_prob_forward.1}
  #allocation0 [shape = 'u32[]', space=smem, size = 0x4, offset = 0x4, fixed_abs, tag = 'smem constant byte address 0x4 - core index']
  #allocation1 [shape = 'u32[144,128]{1,0:T(1,128)}', space=vmem, size = 0x12000, scoped, tag = 'internal scratch']
  %s0 = inlined_call_operand.vmem [shape: bf16[64,16], index: 0, kind: input, shape index: {}]
  %s1 = inlined_call_operand.vmem [shape: bf16[16,128], index: 1, kind: input, shape index: {}]
  %s2 = inlined_call_operand.vmem [shape: bf16[32,128], index: 2, kind: input, shape index: {}]
  %s3 = inlined_call_operand.vmem [shape: f32[1,128], index: 3, kind: input, shape index: {}]
  %s4 = inlined_call_operand.vmem [shape: bf16[32,128], index: 4, kind: input, shape index: {}]
  %s5 = inlined_call_operand.vmem [shape: bf16[32,128], index: 5, kind: input, shape index: {}]
  %s6 = inlined_call_operand.vmem [shape: f32[1,128], index: 6, kind: input, shape index: {}]
  %s7 = inlined_call_operand.vmem [shape: bf16[32,4], index: 7, kind: input, shape index: {}]
  %s8 = inlined_call_operand.vmem [shape: f32[1,4], index: 8, kind: input, shape index: {}]
  %s9 = inlined_call_operand.vmem [shape: f32[8,4], index: 9, kind: output, shape index: {}]
  %s10 = sld [smem:[#allocation0]]
  $region46: #{recurrent_actor_prob_forward.1} parent=0
    _
  %s12 = ssub.s32 1, %s10
  %s13 = scalar_select 0, %s12, %s10
  // Predicated region
  $region2: #{recurrent_actor_prob_forward.1} parent=0 // pred_check
    _
  $region3: #{recurrent_actor_prob_forward.1} parent=0 // pred_check_branch
    %15 = sbr.rel (0) target = $region5
  $region4: #{recurrent_actor_prob_forward.1} parent=0 // pred_region
    _
  $region5: #{recurrent_actor_prob_forward.1} parent=0 // pred_fallthru
    _
  // Predicated region
  $region6: #{recurrent_actor_prob_forward.1} parent=0 // pred_check
    _
  $region7: #{recurrent_actor_prob_forward.1} parent=0 // pred_check_branch
    %17 = sbr.rel (0) target = $region9
  $region8: #{recurrent_actor_prob_forward.1} parent=0 // pred_region
    _
  $region9: #{recurrent_actor_prob_forward.1} parent=0 // pred_fallthru
    _
  // Predicated region
  $region10: #{recurrent_actor_prob_forward.1} parent=0 // pred_check
    _
  $region11: #{recurrent_actor_prob_forward.1} parent=0 // pred_check_branch
    %19 = sbr.rel (0) target = $region13
  $region12: #{recurrent_actor_prob_forward.1} parent=0 // pred_region
    _
  $region13: #{recurrent_actor_prob_forward.1} parent=0 // pred_fallthru
    _
  // Predicated region
  $region14: #{recurrent_actor_prob_forward.1} parent=0 // pred_check
    _
  $region15: #{recurrent_actor_prob_forward.1} parent=0 // pred_check_branch
    %21 = sbr.rel (0) target = $region17
  $region16: #{recurrent_actor_prob_forward.1} parent=0 // pred_region
    _
  $region17: #{recurrent_actor_prob_forward.1} parent=0 // pred_fallthru
    _
  // Predicated region
  $region18: #{recurrent_actor_prob_forward.1} parent=0 // pred_check
    _
  $region19: #{recurrent_actor_prob_forward.1} parent=0 // pred_check_branch
    %23 = sbr.rel (0) target = $region21
  $region20: #{recurrent_actor_prob_forward.1} parent=0 // pred_region
    _
  $region21: #{recurrent_actor_prob_forward.1} parent=0 // pred_fallthru
    _
  // Predicated region
  $region22: #{recurrent_actor_prob_forward.1} parent=0 // pred_check
    _
  $region23: #{recurrent_actor_prob_forward.1} parent=0 // pred_check_branch
    %25 = sbr.rel (0) target = $region25
  $region24: #{recurrent_actor_prob_forward.1} parent=0 // pred_region
    _
  $region25: #{recurrent_actor_prob_forward.1} parent=0 // pred_fallthru
    _
  // Predicated region
  $region26: #{recurrent_actor_prob_forward.1} parent=0 // pred_check
    _
  $region27: #{recurrent_actor_prob_forward.1} parent=0 // pred_check_branch
    %27 = sbr.rel (0) target = $region29
  $region28: #{recurrent_actor_prob_forward.1} parent=0 // pred_region
    _
  $region29: #{recurrent_actor_prob_forward.1} parent=0 // pred_fallthru
    _
  // Predicated region
  $region30: #{recurrent_actor_prob_forward.1} parent=0 // pred_check
    _
  $region31: #{recurrent_actor_prob_forward.1} parent=0 // pred_check_branch
    %29 = sbr.rel (0) target = $region33
  $region32: #{recurrent_actor_prob_forward.1} parent=0 // pred_region
    _
  $region33: #{recurrent_actor_prob_forward.1} parent=0 // pred_fallthru
    _
  // Predicated region
  $region34: #{recurrent_actor_prob_forward.1} parent=0 // pred_check
    _
  $region35: #{recurrent_actor_prob_forward.1} parent=0 // pred_check_branch
    %31 = sbr.rel (0) target = $region37
  $region36: #{recurrent_actor_prob_forward.1} parent=0 // pred_region
    _
  $region37: #{recurrent_actor_prob_forward.1} parent=0 // pred_fallthru
    _
  %v33 = vld [vmem:[%s1] sm:$0xf]
  %v34 = vld [vmem:[%s1 + $0x4] sm:$0xf]
  %v35 = vld [vmem:[%s4] sm:$0xf]
  %v36 = vld [vmem:[%s4 + $0x4] sm:$0xf]
  %v37 = vld [vmem:[%s4 + $0x8] sm:$0xf]
  %v38 = vld [vmem:[%s4 + $0xc] sm:$0xf]
  %v39 = vld [vmem:[%s2] sm:$0xf]
  %v40 = vld [vmem:[%s2 + $0x4] sm:$0xf]
  %v41 = vld [vmem:[%s2 + $0x8] sm:$0xf]
  %v42 = vld [vmem:[%s2 + $0xc] sm:$0xf]
  %v43 = vld [vmem:[%s5] sm:$0xf]
  %v44 = vld [vmem:[%s5 + $0x4] sm:$0xf]
  %v45 = vld [vmem:[%s5 + $0x8] sm:$0xf]
  %v46 = vld [vmem:[%s5 + $0xc] sm:$0xf]
  %v47 = vld [vmem:[%s3] sm:$0x1]
  %v48 = vld [vmem:[%s6] sm:$0x1]
  %v49 = vld [vmem:[%s0] sm:$0xf]
  %v50 = vld [vmem:[%s0 + $0x4] sm:$0xf]
  %v51 = vld [vmem:[%s0 + $0x8] sm:$0xf]
  %v52 = vld [vmem:[%s0 + $0xc] sm:$0xf]
  %v53 = vld [vmem:[%s0 + $0x10] sm:$0xf]
  %v54 = vld [vmem:[%s0 + $0x14] sm:$0xf]
  %v55 = vld [vmem:[%s0 + $0x18] sm:$0xf]
  %v56 = vld [vmem:[%s0 + $0x1c] sm:$0xf]
  %v58 = vlaneseq
  %v59 = vshrl.u32 %v58, 7
  %v60 = vsub.s32 0, %v59
  %v61 = vrot.slane %v47, %v60
  %v71 = vunpack.c.l.b16 %v49
  %v72 = vunpack.c.l.b16 %v50
  %v73 = vunpack.c.l.b16 %v51
  %v74 = vunpack.c.l.b16 %v52
  %v75 = vunpack.c.l.b16 %v53
  %v76 = vunpack.c.l.b16 %v54
  %v77 = vunpack.c.l.b16 %v55
  %v78 = vunpack.c.l.b16 %v56
  %v79 = vpack.c.b16 %v72, %v71
  %v80 = vpack.c.b16 %v74, %v73
  %v81 = vpack.c.b16 %v76, %v75
  %v82 = vpack.c.b16 %v78, %v77
  %v85 = vunpack.c.l.b16 %v33
  %v86 = vunpack.c.l.b16 %v34
  %v87 = vpack.c.b16 %v86, %v85
  %vm89 = vcmask 130048
  %v91 = vsel %vm89, %v79, 0
  %v94 = vsel %vm89, %v80, 0
  %v97 = vsel %vm89, %v81, 0
  %v100 = vsel %vm89, %v82, 0
  %102 = vmatprep.subr.bf16.mxu0 0
  %103 = vmatpush1.bf16.msra.mxu0 0
  %104 = vmatprep.subr.bf16.mxu0 0
  %105 = vmatpush1.bf16.msra.mxu0 0
  %106 = vmatprep.subr.bf16.mxu0 0
  %107 = vmatpush1.bf16.msra.mxu0 0
  %108 = vmatprep.subr.bf16.mxu0 0
  %109 = vmatpush1.bf16.msra.mxu0 0
  %110 = vmatprep.subr.bf16.mxu0 0
  %111 = vmatpush1.bf16.msra.mxu0 0
  %112 = vmatprep.subr.bf16.mxu0 0
  %113 = vmatpush1.bf16.msra.mxu0 0
  %114 = vmatprep.subr.bf16.mxu0 0
  %115 = vmatpush1.bf16.msra.mxu0 0
  %116 = vmatprep.subr.bf16.mxu0 0
  %117 = vmatpush1.bf16.msra.mxu0 %v87
  %118 = vmatprep.subr.bf16.mxu0 0
  %119 = vmatpush2.bf16.msra.mxu0 0
  %120 = vmatprep.subr.bf16.mxu0 0
  %121 = vmatpush2.bf16.msra.mxu0 0
  %122 = vmatprep.subr.bf16.mxu0 0
  %123 = vmatpush2.bf16.msra.mxu0 0
  %124 = vmatprep.subr.bf16.mxu0 0
  %125 = vmatpush2.bf16.msra.mxu0 0
  %126 = vmatprep.subr.bf16.mxu0 0
  %127 = vmatpush2.bf16.msra.mxu0 0
  %128 = vmatprep.subr.bf16.mxu0 0
  %129 = vmatpush2.bf16.msra.mxu0 0
  %130 = vmatprep.subr.bf16.mxu0 0
  %131 = vmatpush2.bf16.msra.mxu0 0
  %132 = vmatprep.subr.bf16.mxu0 0
  %133 = vmatpush2.bf16.msra.mxu0 0
  %134 = vmatprep.mubr.bf16.mxu0 0
  %135 = vmatmul.mubr.bf16.gmra.mxu0 %v91
  %v136 = vpop.f32.mrf.mxu0
  %v137 = vadd.f32 %v61, %v136
  %v138 = vpop.f32.mrf.mxu0
  %v139 = vpop.f32.mrf.mxu0
  %v140 = vadd.f32 %v61, %v139
  %v141 = vpop.f32.mrf.mxu0
  %142 = vmatprep.mubr.bf16.mxu0 0
  %143 = vmatmul.mubr.bf16.gmra.mxu0 %v94
  %v144 = vpop.f32.mrf.mxu0
  %v145 = vadd.f32 %v61, %v144
  %v146 = vpop.f32.mrf.mxu0
  %v147 = vpop.f32.mrf.mxu0
  %v148 = vadd.f32 %v61, %v147
  %v149 = vpop.f32.mrf.mxu0
  %150 = vmatprep.mubr.bf16.mxu0 0
  %151 = vmatmul.mubr.bf16.gmra.mxu0 %v97
  %v152 = vpop.f32.mrf.mxu0
  %v153 = vadd.f32 %v61, %v152
  %v154 = vpop.f32.mrf.mxu0
  %v155 = vpop.f32.mrf.mxu0
  %v156 = vadd.f32 %v61, %v155
  %v157 = vpop.f32.mrf.mxu0
  %158 = vmatprep.mubr.bf16.mxu0 0
  %159 = vmatmul.mubr.bf16.gmra.mxu0 %v100
  %v160 = vpop.f32.mrf.mxu0
  %v161 = vadd.f32 %v61, %v160
  %v162 = vpop.f32.mrf.mxu0
  %v163 = vpop.f32.mrf.mxu0
  %v164 = vadd.f32 %v61, %v163
  %v165 = vpop.f32.mrf.mxu0
  %166 = vdwg.mxu0
  %v171 = vunpack.c.l.b16 %v39
  %v172 = vunpack.c.l.b16 %v40
  %v173 = vunpack.c.l.b16 %v41
  %v174 = vunpack.c.l.b16 %v42
  %v175 = vpack.c.b16 %v172, %v171
  %v176 = vpack.c.b16 %v174, %v173
  %vm179 = vcmask 261120
  %v181 = vsel %vm179, 0, 0
  %183 = vmatprep.subr.bf16.mxu0 0
  %184 = vmatpush1.bf16.msra.mxu0 0
  %185 = vmatprep.subr.bf16.mxu0 0
  %186 = vmatpush1.bf16.msra.mxu0 0
  %187 = vmatprep.subr.bf16.mxu0 0
  %188 = vmatpush1.bf16.msra.mxu0 0
  %189 = vmatprep.subr.bf16.mxu0 0
  %190 = vmatpush1.bf16.msra.mxu0 0
  %191 = vmatprep.subr.bf16.mxu0 0
  %192 = vmatpush1.bf16.msra.mxu0 0
  %193 = vmatprep.subr.bf16.mxu0 0
  %194 = vmatpush1.bf16.msra.mxu0 0
  %195 = vmatprep.subr.bf16.mxu0 0
  %196 = vmatpush1.bf16.msra.mxu0 %v176
  %197 = vmatprep.subr.bf16.mxu0 0
  %198 = vmatpush1.bf16.msra.mxu0 %v175
  %199 = vmatprep.subr.bf16.mxu0 0
  %200 = vmatpush2.bf16.msra.mxu0 0
  %201 = vmatprep.subr.bf16.mxu0 0
  %202 = vmatpush2.bf16.msra.mxu0 0
  %203 = vmatprep.subr.bf16.mxu0 0
  %204 = vmatpush2.bf16.msra.mxu0 0
  %205 = vmatprep.subr.bf16.mxu0 0
  %206 = vmatpush2.bf16.msra.mxu0 0
  %207 = vmatprep.subr.bf16.mxu0 0
  %208 = vmatpush2.bf16.msra.mxu0 0
  %209 = vmatprep.subr.bf16.mxu0 0
  %210 = vmatpush2.bf16.msra.mxu0 0
  %211 = vmatprep.subr.bf16.mxu0 0
  %212 = vmatpush2.bf16.msra.mxu0 0
  %213 = vmatprep.subr.bf16.mxu0 0
  %214 = vmatpush2.bf16.msra.mxu0 0
  %215 = vmatprep.mubr.bf16.mxu0 0
  %216 = vmatmul.mubr.bf16.gmra.mxu0 %v181
  %v217 = vpop.f32.mrf.mxu0
  %v218 = vadd.f32 0.0, %v217
  %v219 = vpop.f32.mrf.mxu0
  %v220 = vpop.f32.mrf.mxu0
  %v221 = vpop.f32.mrf.mxu0
  %222 = vdwg.mxu0
  %v223 = vadd.f32 %v137, %v218
  %v224 = vxor.u32 %v223, 2147483648
  %v225 = vmul.f32 %v224, 1.442695
  %v226 = vpow.pop %v225
  %v227 = vadd.f32 %v226, 1.0
  %v228 = vrcp.pop %v227
  %v229 = vmul.f32 1.0, %v228
  %v230 = vmul.f32 %v229, 2.0
  %v231 = vsub.f32 %v230, 1.0
  %v232 = vmul.f32 %v229, 0.0
  %234 = vrot.lane.b32.xlu0 %v231, 64
  %v235 = vpop.permute.xlu0 %234
  %v237 = vmul.f32 %v229, %v235
  %239 = vrot.lane.b32.xlu0 %v237, 32
  %v240 = vpop.permute.xlu0 %239
  %v242 = vadd.f32 %v232, %v240
  %v243 = vtanh.pop %v242
  %245 = vrot.lane.b32.xlu0 %v243, 64
  %v246 = vpop.permute.xlu0 %245
  %v248 = vmul.f32 %v229, %v246
  %v249 = vpack.c.bf16 %v248, %v248
  %251 = vrot.lane.b32.xlu0 %v249, 32
  %v252 = vpop.permute.xlu0 %251
  %v254 = vsel %vm179, %v252, 0
  %256 = vmatprep.subr.bf16.mxu0 0
  %257 = vmatpush1.bf16.msra.mxu0 0
  %258 = vmatprep.subr.bf16.mxu0 0
  %259 = vmatpush1.bf16.msra.mxu0 0
  %260 = vmatprep.subr.bf16.mxu0 0
  %261 = vmatpush1.bf16.msra.mxu0 0
  %262 = vmatprep.subr.bf16.mxu0 0
  %263 = vmatpush1.bf16.msra.mxu0 0
  %264 = vmatprep.subr.bf16.mxu0 0
  %265 = vmatpush1.bf16.msra.mxu0 0
  %266 = vmatprep.subr.bf16.mxu0 0
  %267 = vmatpush1.bf16.msra.mxu0 0
  %268 = vmatprep.subr.bf16.mxu0 0
  %269 = vmatpush1.bf16.msra.mxu0 %v176
  %270 = vmatprep.subr.bf16.mxu0 0
  %271 = vmatpush1.bf16.msra.mxu0 %v175
  %272 = vmatprep.subr.bf16.mxu0 0
  %273 = vmatpush2.bf16.msra.mxu0 0
  %274 = vmatprep.subr.bf16.mxu0 0
  %275 = vmatpush2.bf16.msra.mxu0 0
  %276 = vmatprep.subr.bf16.mxu0 0
  %277 = vmatpush2.bf16.msra.mxu0 0
  %278 = vmatprep.subr.bf16.mxu0 0
  %279 = vmatpush2.bf16.msra.mxu0 0
  %280 = vmatprep.subr.bf16.mxu0 0
  %281 = vmatpush2.bf16.msra.mxu0 0
  %282 = vmatprep.subr.bf16.mxu0 0
  %283 = vmatpush2.bf16.msra.mxu0 0
  %284 = vmatprep.subr.bf16.mxu0 0
  %285 = vmatpush2.bf16.msra.mxu0 0
  %286 = vmatprep.subr.bf16.mxu0 0
  %287 = vmatpush2.bf16.msra.mxu0 0
  %288 = vmatprep.mubr.bf16.mxu0 0
  %289 = vmatmul.mubr.bf16.gmra.mxu0 %v254
  %v290 = vpop.f32.mrf.mxu0
  %v291 = vadd.f32 0.0, %v290
  %v292 = vpop.f32.mrf.mxu0
  %v293 = vpop.f32.mrf.mxu0
  %v294 = vpop.f32.mrf.mxu0
  %295 = vdwg.mxu0
  %v296 = vadd.f32 %v140, %v291
  %v297 = vxor.u32 %v296, 2147483648
  %v298 = vmul.f32 %v297, 1.442695
  %v299 = vpow.pop %v298
  %v300 = vadd.f32 %v299, 1.0
  %v301 = vrcp.pop %v300
  %v302 = vmul.f32 1.0, %v301
  %v303 = vmul.f32 %v302, 2.0
  %v304 = vsub.f32 %v303, 1.0
  %v305 = vmul.f32 %v302, %v242
  %307 = vrot.lane.b32.xlu0 %v304, 64
  %v308 = vpop.permute.xlu0 %307
  %v310 = vmul.f32 %v302, %v308
  %312 = vrot.lane.b32.xlu0 %v310, 32
  %v313 = vpop.permute.xlu0 %312
  %v315 = vadd.f32 %v305, %v313
  %v316 = vtanh.pop %v315
  %318 = vrot.lane.b32.xlu0 %v316, 64
  %v319 = vpop.permute.xlu0 %318
  %v321 = vmul.f32 %v302, %v319
  %v323 = vlaneseq
  %v324 = vshrl.u32 %v323, 7
  %v325 = vsub.s32 0, %v324
  %v326 = vrot.slane %v48, %v325
  %v332 = vunpack.c.l.b16 %v35
  %v333 = vunpack.c.l.b16 %v36
  %v334 = vunpack.c.l.b16 %v37
  %v335 = vunpack.c.l.b16 %v38
  %v336 = vpack.c.b16 %v333, %v332
  %v337 = vpack.c.b16 %v335, %v334
  %340 = vmatprep.subr.bf16.mxu0 0
  %341 = vmatpush1.bf16.msra.mxu0 0
  %342 = vmatprep.subr.bf16.mxu0 0
  %343 = vmatpush1.bf16.msra.mxu0 0
  %344 = vmatprep.subr.bf16.mxu0 0
  %345 = vmatpush1.bf16.msra.mxu0 0
  %346 = vmatprep.subr.bf16.mxu0 0
  %347 = vmatpush1.bf16.msra.mxu0 0
  %348 = vmatprep.subr.bf16.mxu0 0
  %349 = vmatpush1.bf16.msra.mxu0 0
  %350 = vmatprep.subr.bf16.mxu0 0
  %351 = vmatpush1.bf16.msra.mxu0 0
  %352 = vmatprep.subr.bf16.mxu0 0
  %353 = vmatpush1.bf16.msra.mxu0 %v337
  %354 = vmatprep.subr.bf16.mxu0 0
  %355 = vmatpush1.bf16.msra.mxu0 %v336
  %356 = vmatprep.subr.bf16.mxu0 0
  %357 = vmatpush2.bf16.msra.mxu0 0
  %358 = vmatprep.subr.bf16.mxu0 0
  %359 = vmatpush2.bf16.msra.mxu0 0
  %360 = vmatprep.subr.bf16.mxu0 0
  %361 = vmatpush2.bf16.msra.mxu0 0
  %362 = vmatprep.subr.bf16.mxu0 0
  %363 = vmatpush2.bf16.msra.mxu0 0
  %364 = vmatprep.subr.bf16.mxu0 0
  %365 = vmatpush2.bf16.msra.mxu0 0
  %366 = vmatprep.subr.bf16.mxu0 0
  %367 = vmatpush2.bf16.msra.mxu0 0
  %368 = vmatprep.subr.bf16.mxu0 0
  %369 = vmatpush2.bf16.msra.mxu0 0
  %370 = vmatprep.subr.bf16.mxu0 0
  %371 = vmatpush2.bf16.msra.mxu0 0
  %372 = vmatprep.mubr.bf16.mxu0 0
  %373 = vmatmul.mubr.bf16.gmra.mxu0 %v254
  %v374 = vpop.f32.mrf.mxu0
  %v375 = vadd.f32 %v326, %v374
  %v376 = vpop.f32.mrf.mxu0
  %v377 = vpop.f32.mrf.mxu0
  %v378 = vpop.f32.mrf.mxu0
  %379 = vdwg.mxu0
  %v384 = vunpack.c.l.b16 %v43
  %v385 = vunpack.c.l.b16 %v44
  %v386 = vunpack.c.l.b16 %v45
  %v387 = vunpack.c.l.b16 %v46
  %v388 = vpack.c.b16 %v385, %v384
  %v389 = vpack.c.b16 %v387, %v386
  %392 = vmatprep.subr.bf16.mxu0 0
  %393 = vmatpush1.bf16.msra.mxu0 0
  %394 = vmatprep.subr.bf16.mxu0 0
  %395 = vmatpush1.bf16.msra.mxu0 0
  %396 = vmatprep.subr.bf16.mxu0 0
  %397 = vmatpush1.bf16.msra.mxu0 0
  %398 = vmatprep.subr.bf16.mxu0 0
  %399 = vmatpush1.bf16.msra.mxu0 0
  %400 = vmatprep.subr.bf16.mxu0 0
  %401 = vmatpush1.bf16.msra.mxu0 0
  %402 = vmatprep.subr.bf16.mxu0 0
  %403 = vmatpush1.bf16.msra.mxu0 0
  %404 = vmatprep.subr.bf16.mxu0 0
  %405 = vmatpush1.bf16.msra.mxu0 %v389
  %406 = vmatprep.subr.bf16.mxu0 0
  %407 = vmatpush1.bf16.msra.mxu0 %v388
  %408 = vmatprep.subr.bf16.mxu0 0
  %409 = vmatpush2.bf16.msra.mxu0 0
  %410 = vmatprep.subr.bf16.mxu0 0
  %411 = vmatpush2.bf16.msra.mxu0 0
  %412 = vmatprep.subr.bf16.mxu0 0
  %413 = vmatpush2.bf16.msra.mxu0 0
  %414 = vmatprep.subr.bf16.mxu0 0
  %415 = vmatpush2.bf16.msra.mxu0 0
  %416 = vmatprep.subr.bf16.mxu0 0
  %417 = vmatpush2.bf16.msra.mxu0 0
  %418 = vmatprep.subr.bf16.mxu0 0
  %419 = vmatpush2.bf16.msra.mxu0 0
  %420 = vmatprep.subr.bf16.mxu0 0
  %421 = vmatpush2.bf16.msra.mxu0 0
  %422 = vmatprep.subr.bf16.mxu0 0
  %423 = vmatpush2.bf16.msra.mxu0 0
  %424 = vmatprep.mubr.bf16.mxu0 0
  %425 = vmatmul.mubr.bf16.gmra.mxu0 %v181
  %v426 = vpop.f32.mrf.mxu0
  %v427 = vadd.f32 0.0, %v426
  %v428 = vpop.f32.mrf.mxu0
  %v429 = vpop.f32.mrf.mxu0
  %v430 = vpop.f32.mrf.mxu0
  %431 = vdwg.mxu0
  %v432 = vadd.f32 %v375, %v427
  %v433 = vxor.u32 %v432, 2147483648
  %v434 = vmul.f32 %v433, 1.442695
  %v435 = vpow.pop %v434
  %v436 = vadd.f32 %v435, 1.0
  %v437 = vrcp.pop %v436
  %v438 = vmul.f32 1.0, %v437
  %v439 = vmul.f32 %v438, 2.0
  %v440 = vsub.f32 %v439, 1.0
  %v441 = vmul.f32 %v438, 0.0
  %443 = vrot.lane.b32.xlu0 %v440, 64
  %v444 = vpop.permute.xlu0 %443
  %v446 = vmul.f32 %v438, %v444
  %448 = vrot.lane.b32.xlu0 %v446, 32
  %v449 = vpop.permute.xlu0 %448
  %v451 = vadd.f32 %v441, %v449
  %v452 = vtanh.pop %v451
  %454 = vrot.lane.b32.xlu0 %v452, 64
  %v455 = vpop.permute.xlu0 %454
  %v457 = vmul.f32 %v438, %v455
  %v458 = vpack.c.bf16 %v321, %v321
  %460 = vrot.lane.b32.xlu0 %v458, 32
  %v461 = vpop.permute.xlu0 %460
  %v463 = vsel %vm179, %v461, 0
  %465 = vmatprep.subr.bf16.mxu0 0
  %466 = vmatpush1.bf16.msra.mxu0 0
  %467 = vmatprep.subr.bf16.mxu0 0
  %468 = vmatpush1.bf16.msra.mxu0 0
  %469 = vmatprep.subr.bf16.mxu0 0
  %470 = vmatpush1.bf16.msra.mxu0 0
  %471 = vmatprep.subr.bf16.mxu0 0
  %472 = vmatpush1.bf16.msra.mxu0 0
  %473 = vmatprep.subr.bf16.mxu0 0
  %474 = vmatpush1.bf16.msra.mxu0 0
  %475 = vmatprep.subr.bf16.mxu0 0
  %476 = vmatpush1.bf16.msra.mxu0 0
  %477 = vmatprep.subr.bf16.mxu0 0
  %478 = vmatpush1.bf16.msra.mxu0 %v176
  %479 = vmatprep.subr.bf16.mxu0 0
  %480 = vmatpush1.bf16.msra.mxu0 %v175
  %481 = vmatprep.subr.bf16.mxu0 0
  %482 = vmatpush2.bf16.msra.mxu0 0
  %483 = vmatprep.subr.bf16.mxu0 0
  %484 = vmatpush2.bf16.msra.mxu0 0
  %485 = vmatprep.subr.bf16.mxu0 0
  %486 = vmatpush2.bf16.msra.mxu0 0
  %487 = vmatprep.subr.bf16.mxu0 0
  %488 = vmatpush2.bf16.msra.mxu0 0
  %489 = vmatprep.subr.bf16.mxu0 0
  %490 = vmatpush2.bf16.msra.mxu0 0
  %491 = vmatprep.subr.bf16.mxu0 0
  %492 = vmatpush2.bf16.msra.mxu0 0
  %493 = vmatprep.subr.bf16.mxu0 0
  %494 = vmatpush2.bf16.msra.mxu0 0
  %495 = vmatprep.subr.bf16.mxu0 0
  %496 = vmatpush2.bf16.msra.mxu0 0
  %497 = vmatprep.mubr.bf16.mxu0 0
  %498 = vmatmul.mubr.bf16.gmra.mxu0 %v463
  %v499 = vpop.f32.mrf.mxu0
  %v500 = vadd.f32 0.0, %v499
  %v501 = vpop.f32.mrf.mxu0
  %v502 = vpop.f32.mrf.mxu0
  %v503 = vpop.f32.mrf.mxu0
  %504 = vdwg.mxu0
  %v505 = vadd.f32 %v145, %v500
  %v506 = vxor.u32 %v505, 2147483648
  %v507 = vmul.f32 %v506, 1.442695
  %v508 = vpow.pop %v507
  %v509 = vadd.f32 %v508, 1.0
  %v510 = vrcp.pop %v509
  %v511 = vmul.f32 1.0, %v510
  %v512 = vmul.f32 %v511, 2.0
  %v513 = vsub.f32 %v512, 1.0
  %v514 = vmul.f32 %v511, %v315
  %516 = vrot.lane.b32.xlu0 %v513, 64
  %v517 = vpop.permute.xlu0 %516
  %v519 = vmul.f32 %v511, %v517
  %521 = vrot.lane.b32.xlu0 %v519, 32
  %v522 = vpop.permute.xlu0 %521
  %v524 = vadd.f32 %v514, %v522
  %v525 = vtanh.pop %v524
  %527 = vrot.lane.b32.xlu0 %v525, 64
  %v528 = vpop.permute.xlu0 %527
  %v530 = vmul.f32 %v511, %v528
  %531 = vmatprep.subr.bf16.mxu0 0
  %532 = vmatpush1.bf16.msra.mxu0 0
  %533 = vmatprep.subr.bf16.mxu0 0
  %534 = vmatpush1.bf16.msra.mxu0 0
  %535 = vmatprep.subr.bf16.mxu0 0
  %536 = vmatpush1.bf16.msra.mxu0 0
  %537 = vmatprep.subr.bf16.mxu0 0
  %538 = vmatpush1.bf16.msra.mxu0 0
  %539 = vmatprep.subr.bf16.mxu0 0
  %540 = vmatpush1.bf16.msra.mxu0 0
  %541 = vmatprep.subr.bf16.mxu0 0
  %542 = vmatpush1.bf16.msra.mxu0 0
  %543 = vmatprep.subr.bf16.mxu0 0
  %544 = vmatpush1.bf16.msra.mxu0 %v337
  %545 = vmatprep.subr.bf16.mxu0 0
  %546 = vmatpush1.bf16.msra.mxu0 %v336
  %547 = vmatprep.subr.bf16.mxu0 0
  %548 = vmatpush2.bf16.msra.mxu0 0
  %549 = vmatprep.subr.bf16.mxu0 0
  %550 = vmatpush2.bf16.msra.mxu0 0
  %551 = vmatprep.subr.bf16.mxu0 0
  %552 = vmatpush2.bf16.msra.mxu0 0
  %553 = vmatprep.subr.bf16.mxu0 0
  %554 = vmatpush2.bf16.msra.mxu0 0
  %555 = vmatprep.subr.bf16.mxu0 0
  %556 = vmatpush2.bf16.msra.mxu0 0
  %557 = vmatprep.subr.bf16.mxu0 0
  %558 = vmatpush2.bf16.msra.mxu0 0
  %559 = vmatprep.subr.bf16.mxu0 0
  %560 = vmatpush2.bf16.msra.mxu0 0
  %561 = vmatprep.subr.bf16.mxu0 0
  %562 = vmatpush2.bf16.msra.mxu0 0
  %563 = vmatprep.mubr.bf16.mxu0 0
  %564 = vmatmul.mubr.bf16.gmra.mxu0 %v463
  %v565 = vpop.f32.mrf.mxu0
  %v566 = vadd.f32 %v326, %v565
  %v567 = vpop.f32.mrf.mxu0
  %v568 = vpop.f32.mrf.mxu0
  %v569 = vpop.f32.mrf.mxu0
  %570 = vdwg.mxu0
  %v571 = vpack.c.bf16 %v457, %v457
  %573 = vrot.lane.b32.xlu0 %v571, 32
  %v574 = vpop.permute.xlu0 %573
  %v576 = vsel %vm179, %v574, 0
  %578 = vmatprep.subr.bf16.mxu0 0
  %579 = vmatpush1.bf16.msra.mxu0 0
  %580 = vmatprep.subr.bf16.mxu0 0
  %581 = vmatpush1.bf16.msra.mxu0 0
  %582 = vmatprep.subr.bf16.mxu0 0
  %583 = vmatpush1.bf16.msra.mxu0 0
  %584 = vmatprep.subr.bf16.mxu0 0
  %585 = vmatpush1.bf16.msra.mxu0 0
  %586 = vmatprep.subr.bf16.mxu0 0
  %587 = vmatpush1.bf16.msra.mxu0 0
  %588 = vmatprep.subr.bf16.mxu0 0
  %589 = vmatpush1.bf16.msra.mxu0 0
  %590 = vmatprep.subr.bf16.mxu0 0
  %591 = vmatpush1.bf16.msra.mxu0 %v389
  %592 = vmatprep.subr.bf16.mxu0 0
  %593 = vmatpush1.bf16.msra.mxu0 %v388
  %594 = vmatprep.subr.bf16.mxu0 0
  %595 = vmatpush2.bf16.msra.mxu0 0
  %596 = vmatprep.subr.bf16.mxu0 0
  %597 = vmatpush2.bf16.msra.mxu0 0
  %598 = vmatprep.subr.bf16.mxu0 0
  %599 = vmatpush2.bf16.msra.mxu0 0
  %600 = vmatprep.subr.bf16.mxu0 0
  %601 = vmatpush2.bf16.msra.mxu0 0
  %602 = vmatprep.subr.bf16.mxu0 0
  %603 = vmatpush2.bf16.msra.mxu0 0
  %604 = vmatprep.subr.bf16.mxu0 0
  %605 = vmatpush2.bf16.msra.mxu0 0
  %606 = vmatprep.subr.bf16.mxu0 0
  %607 = vmatpush2.bf16.msra.mxu0 0
  %608 = vmatprep.subr.bf16.mxu0 0
  %609 = vmatpush2.bf16.msra.mxu0 0
  %610 = vmatprep.mubr.bf16.mxu0 0
  %611 = vmatmul.mubr.bf16.gmra.mxu0 %v576
  %v612 = vpop.f32.mrf.mxu0
  %v613 = vadd.f32 0.0, %v612
  %v614 = vpop.f32.mrf.mxu0
  %v615 = vpop.f32.mrf.mxu0
  %v616 = vpop.f32.mrf.mxu0
  %617 = vdwg.mxu0
  %v618 = vadd.f32 %v566, %v613
  %v619 = vxor.u32 %v618, 2147483648
  %v620 = vmul.f32 %v619, 1.442695
  %v621 = vpow.pop %v620
  %v622 = vadd.f32 %v621, 1.0
  %v623 = vrcp.pop %v622
  %v624 = vmul.f32 1.0, %v623
  %v625 = vmul.f32 %v624, 2.0
  %v626 = vsub.f32 %v625, 1.0
  %v627 = vmul.f32 %v624, %v451
  %629 = vrot.lane.b32.xlu0 %v626, 64
  %v630 = vpop.permute.xlu0 %629
  %v632 = vmul.f32 %v624, %v630
  %634 = vrot.lane.b32.xlu0 %v632, 32
  %v635 = vpop.permute.xlu0 %634
  %v637 = vadd.f32 %v627, %v635
  %v638 = vtanh.pop %v637
  %640 = vrot.lane.b32.xlu0 %v638, 64
  %v641 = vpop.permute.xlu0 %640
  %v643 = vmul.f32 %v624, %v641
  %v644 = vpack.c.bf16 %v530, %v530
  %646 = vrot.lane.b32.xlu0 %v644, 32
  %v647 = vpop.permute.xlu0 %646
  %v649 = vsel %vm179, %v647, 0
  %651 = vmatprep.subr.bf16.mxu0 0
  %652 = vmatpush1.bf16.msra.mxu0 0
  %653 = vmatprep.subr.bf16.mxu0 0
  %654 = vmatpush1.bf16.msra.mxu0 0
  %655 = vmatprep.subr.bf16.mxu0 0
  %656 = vmatpush1.bf16.msra.mxu0 0
  %657 = vmatprep.subr.bf16.mxu0 0
  %658 = vmatpush1.bf16.msra.mxu0 0
  %659 = vmatprep.subr.bf16.mxu0 0
  %660 = vmatpush1.bf16.msra.mxu0 0
  %661 = vmatprep.subr.bf16.mxu0 0
  %662 = vmatpush1.bf16.msra.mxu0 0
  %663 = vmatprep.subr.bf16.mxu0 0
  %664 = vmatpush1.bf16.msra.mxu0 %v176
  %665 = vmatprep.subr.bf16.mxu0 0
  %666 = vmatpush1.bf16.msra.mxu0 %v175
  %667 = vmatprep.subr.bf16.mxu0 0
  %668 = vmatpush2.bf16.msra.mxu0 0
  %669 = vmatprep.subr.bf16.mxu0 0
  %670 = vmatpush2.bf16.msra.mxu0 0
  %671 = vmatprep.subr.bf16.mxu0 0
  %672 = vmatpush2.bf16.msra.mxu0 0
  %673 = vmatprep.subr.bf16.mxu0 0
  %674 = vmatpush2.bf16.msra.mxu0 0
  %675 = vmatprep.subr.bf16.mxu0 0
  %676 = vmatpush2.bf16.msra.mxu0 0
  %677 = vmatprep.subr.bf16.mxu0 0
  %678 = vmatpush2.bf16.msra.mxu0 0
  %679 = vmatprep.subr.bf16.mxu0 0
  %680 = vmatpush2.bf16.msra.mxu0 0
  %681 = vmatprep.subr.bf16.mxu0 0
  %682 = vmatpush2.bf16.msra.mxu0 0
  %683 = vmatprep.mubr.bf16.mxu0 0
  %684 = vmatmul.mubr.bf16.gmra.mxu0 %v649
  %v685 = vpop.f32.mrf.mxu0
  %v686 = vadd.f32 0.0, %v685
  %v687 = vpop.f32.mrf.mxu0
  %v688 = vpop.f32.mrf.mxu0
  %v689 = vpop.f32.mrf.mxu0
  %690 = vdwg.mxu0
  %v691 = vadd.f32 %v148, %v686
  %v692 = vxor.u32 %v691, 2147483648
  %v693 = vmul.f32 %v692, 1.442695
  %v694 = vpow.pop %v693
  %v695 = vadd.f32 %v694, 1.0
  %v696 = vrcp.pop %v695
  %v697 = vmul.f32 1.0, %v696
  %v698 = vmul.f32 %v697, 2.0
  %v699 = vsub.f32 %v698, 1.0
  %v700 = vmul.f32 %v697, %v524
  %702 = vrot.lane.b32.xlu0 %v699, 64
  %v703 = vpop.permute.xlu0 %702
  %v705 = vmul.f32 %v697, %v703
  %707 = vrot.lane.b32.xlu0 %v705, 32
  %v708 = vpop.permute.xlu0 %707
  %v710 = vadd.f32 %v700, %v708
  %v711 = vtanh.pop %v710
  %713 = vrot.lane.b32.xlu0 %v711, 64
  %v714 = vpop.permute.xlu0 %713
  %v716 = vmul.f32 %v697, %v714
  %717 = vmatprep.subr.bf16.mxu0 0
  %718 = vmatpush1.bf16.msra.mxu0 0
  %719 = vmatprep.subr.bf16.mxu0 0
  %720 = vmatpush1.bf16.msra.mxu0 0
  %721 = vmatprep.subr.bf16.mxu0 0
  %722 = vmatpush1.bf16.msra.mxu0 0
  %723 = vmatprep.subr.bf16.mxu0 0
  %724 = vmatpush1.bf16.msra.mxu0 0
  %725 = vmatprep.subr.bf16.mxu0 0
  %726 = vmatpush1.bf16.msra.mxu0 0
  %727 = vmatprep.subr.bf16.mxu0 0
  %728 = vmatpush1.bf16.msra.mxu0 0
  %729 = vmatprep.subr.bf16.mxu0 0
  %730 = vmatpush1.bf16.msra.mxu0 %v337
  %731 = vmatprep.subr.bf16.mxu0 0
  %732 = vmatpush1.bf16.msra.mxu0 %v336
  %733 = vmatprep.subr.bf16.mxu0 0
  %734 = vmatpush2.bf16.msra.mxu0 0
  %735 = vmatprep.subr.bf16.mxu0 0
  %736 = vmatpush2.bf16.msra.mxu0 0
  %737 = vmatprep.subr.bf16.mxu0 0
  %738 = vmatpush2.bf16.msra.mxu0 0
  %739 = vmatprep.subr.bf16.mxu0 0
  %740 = vmatpush2.bf16.msra.mxu0 0
  %741 = vmatprep.subr.bf16.mxu0 0
  %742 = vmatpush2.bf16.msra.mxu0 0
  %743 = vmatprep.subr.bf16.mxu0 0
  %744 = vmatpush2.bf16.msra.mxu0 0
  %745 = vmatprep.subr.bf16.mxu0 0
  %746 = vmatpush2.bf16.msra.mxu0 0
  %747 = vmatprep.subr.bf16.mxu0 0
  %748 = vmatpush2.bf16.msra.mxu0 0
  %749 = vmatprep.mubr.bf16.mxu0 0
  %750 = vmatmul.mubr.bf16.gmra.mxu0 %v649
  %v751 = vpop.f32.mrf.mxu0
  %v752 = vadd.f32 %v326, %v751
  %v753 = vpop.f32.mrf.mxu0
  %v754 = vpop.f32.mrf.mxu0
  %v755 = vpop.f32.mrf.mxu0
  %756 = vdwg.mxu0
  %v757 = vpack.c.bf16 %v643, %v643
  %759 = vrot.lane.b32.xlu0 %v757, 32
  %v760 = vpop.permute.xlu0 %759
  %v762 = vsel %vm179, %v760, 0
  %764 = vmatprep.subr.bf16.mxu0 0
  %765 = vmatpush1.bf16.msra.mxu0 0
  %766 = vmatprep.subr.bf16.mxu0 0
  %767 = vmatpush1.bf16.msra.mxu0 0
  %768 = vmatprep.subr.bf16.mxu0 0
  %769 = vmatpush1.bf16.msra.mxu0 0
  %770 = vmatprep.subr.bf16.mxu0 0
  %771 = vmatpush1.bf16.msra.mxu0 0
  %772 = vmatprep.subr.bf16.mxu0 0
  %773 = vmatpush1.bf16.msra.mxu0 0
  %774 = vmatprep.subr.bf16.mxu0 0
  %775 = vmatpush1.bf16.msra.mxu0 0
  %776 = vmatprep.subr.bf16.mxu0 0
  %777 = vmatpush1.bf16.msra.mxu0 %v389
  %778 = vmatprep.subr.bf16.mxu0 0
  %779 = vmatpush1.bf16.msra.mxu0 %v388
  %780 = vmatprep.subr.bf16.mxu0 0
  %781 = vmatpush2.bf16.msra.mxu0 0
  %782 = vmatprep.subr.bf16.mxu0 0
  %783 = vmatpush2.bf16.msra.mxu0 0
  %784 = vmatprep.subr.bf16.mxu0 0
  %785 = vmatpush2.bf16.msra.mxu0 0
  %786 = vmatprep.subr.bf16.mxu0 0
  %787 = vmatpush2.bf16.msra.mxu0 0
  %788 = vmatprep.subr.bf16.mxu0 0
  %789 = vmatpush2.bf16.msra.mxu0 0
  %790 = vmatprep.subr.bf16.mxu0 0
  %791 = vmatpush2.bf16.msra.mxu0 0
  %792 = vmatprep.subr.bf16.mxu0 0
  %793 = vmatpush2.bf16.msra.mxu0 0
  %794 = vmatprep.subr.bf16.mxu0 0
  %795 = vmatpush2.bf16.msra.mxu0 0
  %796 = vmatprep.mubr.bf16.mxu0 0
  %797 = vmatmul.mubr.bf16.gmra.mxu0 %v762
  %v798 = vpop.f32.mrf.mxu0
  %v799 = vadd.f32 0.0, %v798
  %v800 = vpop.f32.mrf.mxu0
  %v801 = vpop.f32.mrf.mxu0
  %v802 = vpop.f32.mrf.mxu0
  %803 = vdwg.mxu0
  %v804 = vadd.f32 %v752, %v799
  %v805 = vxor.u32 %v804, 2147483648
  %v806 = vmul.f32 %v805, 1.442695
  %v807 = vpow.pop %v806
  %v808 = vadd.f32 %v807, 1.0
  %v809 = vrcp.pop %v808
  %v810 = vmul.f32 1.0, %v809
  %v811 = vmul.f32 %v810, 2.0
  %v812 = vsub.f32 %v811, 1.0
  %v813 = vmul.f32 %v810, %v637
  %815 = vrot.lane.b32.xlu0 %v812, 64
  %v816 = vpop.permute.xlu0 %815
  %v818 = vmul.f32 %v810, %v816
  %820 = vrot.lane.b32.xlu0 %v818, 32
  %v821 = vpop.permute.xlu0 %820
  %v823 = vadd.f32 %v813, %v821
  %v824 = vtanh.pop %v823
  %826 = vrot.lane.b32.xlu0 %v824, 64
  %v827 = vpop.permute.xlu0 %826
  %v829 = vmul.f32 %v810, %v827
  %v830 = vpack.c.bf16 %v716, %v716
  %832 = vrot.lane.b32.xlu0 %v830, 32
  %v833 = vpop.permute.xlu0 %832
  %v835 = vsel %vm179, %v833, 0
  %837 = vmatprep.subr.bf16.mxu0 0
  %838 = vmatpush1.bf16.msra.mxu0 0
  %839 = vmatprep.subr.bf16.mxu0 0
  %840 = vmatpush1.bf16.msra.mxu0 0
  %841 = vmatprep.subr.bf16.mxu0 0
  %842 = vmatpush1.bf16.msra.mxu0 0
  %843 = vmatprep.subr.bf16.mxu0 0
  %844 = vmatpush1.bf16.msra.mxu0 0
  %845 = vmatprep.subr.bf16.mxu0 0
  %846 = vmatpush1.bf16.msra.mxu0 0
  %847 = vmatprep.subr.bf16.mxu0 0
  %848 = vmatpush1.bf16.msra.mxu0 0
  %849 = vmatprep.subr.bf16.mxu0 0
  %850 = vmatpush1.bf16.msra.mxu0 %v176
  %851 = vmatprep.subr.bf16.mxu0 0
  %852 = vmatpush1.bf16.msra.mxu0 %v175
  %853 = vmatprep.subr.bf16.mxu0 0
  %854 = vmatpush2.bf16.msra.mxu0 0
  %855 = vmatprep.subr.bf16.mxu0 0
  %856 = vmatpush2.bf16.msra.mxu0 0
  %857 = vmatprep.subr.bf16.mxu0 0
  %858 = vmatpush2.bf16.msra.mxu0 0
  %859 = vmatprep.subr.bf16.mxu0 0
  %860 = vmatpush2.bf16.msra.mxu0 0
  %861 = vmatprep.subr.bf16.mxu0 0
  %862 = vmatpush2.bf16.msra.mxu0 0
  %863 = vmatprep.subr.bf16.mxu0 0
  %864 = vmatpush2.bf16.msra.mxu0 0
  %865 = vmatprep.subr.bf16.mxu0 0
  %866 = vmatpush2.bf16.msra.mxu0 0
  %867 = vmatprep.subr.bf16.mxu0 0
  %868 = vmatpush2.bf16.msra.mxu0 0
  %869 = vmatprep.mubr.bf16.mxu0 0
  %870 = vmatmul.mubr.bf16.gmra.mxu0 %v835
  %v871 = vpop.f32.mrf.mxu0
  %v872 = vadd.f32 0.0, %v871
  %v873 = vpop.f32.mrf.mxu0
  %v874 = vpop.f32.mrf.mxu0
  %v875 = vpop.f32.mrf.mxu0
  %876 = vdwg.mxu0
  %v877 = vadd.f32 %v153, %v872
  %v878 = vxor.u32 %v877, 2147483648
  %v879 = vmul.f32 %v878, 1.442695
  %v880 = vpow.pop %v879
  %v881 = vadd.f32 %v880, 1.0
  %v882 = vrcp.pop %v881
  %v883 = vmul.f32 1.0, %v882
  %v884 = vmul.f32 %v883, 2.0
  %v885 = vsub.f32 %v884, 1.0
  %v886 = vmul.f32 %v883, %v710
  %888 = vrot.lane.b32.xlu0 %v885, 64
  %v889 = vpop.permute.xlu0 %888
  %v891 = vmul.f32 %v883, %v889
  %893 = vrot.lane.b32.xlu0 %v891, 32
  %v894 = vpop.permute.xlu0 %893
  %v896 = vadd.f32 %v886, %v894
  %v897 = vtanh.pop %v896
  %899 = vrot.lane.b32.xlu0 %v897, 64
  %v900 = vpop.permute.xlu0 %899
  %v902 = vmul.f32 %v883, %v900
  %903 = vmatprep.subr.bf16.mxu0 0
  %904 = vmatpush1.bf16.msra.mxu0 0
  %905 = vmatprep.subr.bf16.mxu0 0
  %906 = vmatpush1.bf16.msra.mxu0 0
  %907 = vmatprep.subr.bf16.mxu0 0
  %908 = vmatpush1.bf16.msra.mxu0 0
  %909 = vmatprep.subr.bf16.mxu0 0
  %910 = vmatpush1.bf16.msra.mxu0 0
  %911 = vmatprep.subr.bf16.mxu0 0
  %912 = vmatpush1.bf16.msra.mxu0 0
  %913 = vmatprep.subr.bf16.mxu0 0
  %914 = vmatpush1.bf16.msra.mxu0 0
  %915 = vmatprep.subr.bf16.mxu0 0
  %916 = vmatpush1.bf16.msra.mxu0 %v337
  %917 = vmatprep.subr.bf16.mxu0 0
  %918 = vmatpush1.bf16.msra.mxu0 %v336
  %919 = vmatprep.subr.bf16.mxu0 0
  %920 = vmatpush2.bf16.msra.mxu0 0
  %921 = vmatprep.subr.bf16.mxu0 0
  %922 = vmatpush2.bf16.msra.mxu0 0
  %923 = vmatprep.subr.bf16.mxu0 0
  %924 = vmatpush2.bf16.msra.mxu0 0
  %925 = vmatprep.subr.bf16.mxu0 0
  %926 = vmatpush2.bf16.msra.mxu0 0
  %927 = vmatprep.subr.bf16.mxu0 0
  %928 = vmatpush2.bf16.msra.mxu0 0
  %929 = vmatprep.subr.bf16.mxu0 0
  %930 = vmatpush2.bf16.msra.mxu0 0
  %931 = vmatprep.subr.bf16.mxu0 0
  %932 = vmatpush2.bf16.msra.mxu0 0
  %933 = vmatprep.subr.bf16.mxu0 0
  %934 = vmatpush2.bf16.msra.mxu0 0
  %935 = vmatprep.mubr.bf16.mxu0 0
  %936 = vmatmul.mubr.bf16.gmra.mxu0 %v835
  %v937 = vpop.f32.mrf.mxu0
  %v938 = vadd.f32 %v326, %v937
  %v939 = vpop.f32.mrf.mxu0
  %v940 = vpop.f32.mrf.mxu0
  %v941 = vpop.f32.mrf.mxu0
  %942 = vdwg.mxu0
  %v943 = vpack.c.bf16 %v829, %v829
  %945 = vrot.lane.b32.xlu0 %v943, 32
  %v946 = vpop.permute.xlu0 %945
  %v948 = vsel %vm179, %v946, 0
  %950 = vmatprep.subr.bf16.mxu0 0
  %951 = vmatpush1.bf16.msra.mxu0 0
  %952 = vmatprep.subr.bf16.mxu0 0
  %953 = vmatpush1.bf16.msra.mxu0 0
  %954 = vmatprep.subr.bf16.mxu0 0
  %955 = vmatpush1.bf16.msra.mxu0 0
  %956 = vmatprep.subr.bf16.mxu0 0
  %957 = vmatpush1.bf16.msra.mxu0 0
  %958 = vmatprep.subr.bf16.mxu0 0
  %959 = vmatpush1.bf16.msra.mxu0 0
  %960 = vmatprep.subr.bf16.mxu0 0
  %961 = vmatpush1.bf16.msra.mxu0 0
  %962 = vmatprep.subr.bf16.mxu0 0
  %963 = vmatpush1.bf16.msra.mxu0 %v389
  %964 = vmatprep.subr.bf16.mxu0 0
  %965 = vmatpush1.bf16.msra.mxu0 %v388
  %966 = vmatprep.subr.bf16.mxu0 0
  %967 = vmatpush2.bf16.msra.mxu0 0
  %968 = vmatprep.subr.bf16.mxu0 0
  %969 = vmatpush2.bf16.msra.mxu0 0
  %970 = vmatprep.subr.bf16.mxu0 0
  %971 = vmatpush2.bf16.msra.mxu0 0
  %972 = vmatprep.subr.bf16.mxu0 0
  %973 = vmatpush2.bf16.msra.mxu0 0
  %974 = vmatprep.subr.bf16.mxu0 0
  %975 = vmatpush2.bf16.msra.mxu0 0
  %976 = vmatprep.subr.bf16.mxu0 0
  %977 = vmatpush2.bf16.msra.mxu0 0
  %978 = vmatprep.subr.bf16.mxu0 0
  %979 = vmatpush2.bf16.msra.mxu0 0
  %980 = vmatprep.subr.bf16.mxu0 0
  %981 = vmatpush2.bf16.msra.mxu0 0
  %982 = vmatprep.mubr.bf16.mxu0 0
  %983 = vmatmul.mubr.bf16.gmra.mxu0 %v948
  %v984 = vpop.f32.mrf.mxu0
  %v985 = vadd.f32 0.0, %v984
  %v986 = vpop.f32.mrf.mxu0
  %v987 = vpop.f32.mrf.mxu0
  %v988 = vpop.f32.mrf.mxu0
  %989 = vdwg.mxu0
  %v990 = vadd.f32 %v938, %v985
  %v991 = vxor.u32 %v990, 2147483648
  %v992 = vmul.f32 %v991, 1.442695
  %v993 = vpow.pop %v992
  %v994 = vadd.f32 %v993, 1.0
  %v995 = vrcp.pop %v994
  %v996 = vmul.f32 1.0, %v995
  %v997 = vmul.f32 %v996, 2.0
  %v998 = vsub.f32 %v997, 1.0
  %v999 = vmul.f32 %v996, %v823
  %1001 = vrot.lane.b32.xlu0 %v998, 64
  %v1002 = vpop.permute.xlu0 %1001
  %v1004 = vmul.f32 %v996, %v1002
  %1006 = vrot.lane.b32.xlu0 %v1004, 32
  %v1007 = vpop.permute.xlu0 %1006
  %v1009 = vadd.f32 %v999, %v1007
  %v1010 = vtanh.pop %v1009
  %1012 = vrot.lane.b32.xlu0 %v1010, 64
  %v1013 = vpop.permute.xlu0 %1012
  %v1015 = vmul.f32 %v996, %v1013
  %v1016 = vpack.c.bf16 %v902, %v902
  %1018 = vrot.lane.b32.xlu0 %v1016, 32
  %v1019 = vpop.permute.xlu0 %1018
  %v1021 = vsel %vm179, %v1019, 0
  %1023 = vmatprep.subr.bf16.mxu0 0
  %1024 = vmatpush1.bf16.msra.mxu0 0
  %1025 = vmatprep.subr.bf16.mxu0 0
  %1026 = vmatpush1.bf16.msra.mxu0 0
  %1027 = vmatprep.subr.bf16.mxu0 0
  %1028 = vmatpush1.bf16.msra.mxu0 0
  %1029 = vmatprep.subr.bf16.mxu0 0
  %1030 = vmatpush1.bf16.msra.mxu0 0
  %1031 = vmatprep.subr.bf16.mxu0 0
  %1032 = vmatpush1.bf16.msra.mxu0 0
  %1033 = vmatprep.subr.bf16.mxu0 0
  %1034 = vmatpush1.bf16.msra.mxu0 0
  %1035 = vmatprep.subr.bf16.mxu0 0
  %1036 = vmatpush1.bf16.msra.mxu0 %v176
  %1037 = vmatprep.subr.bf16.mxu0 0
  %1038 = vmatpush1.bf16.msra.mxu0 %v175
  %1039 = vmatprep.subr.bf16.mxu0 0
  %1040 = vmatpush2.bf16.msra.mxu0 0
  %1041 = vmatprep.subr.bf16.mxu0 0
  %1042 = vmatpush2.bf16.msra.mxu0 0
  %1043 = vmatprep.subr.bf16.mxu0 0
  %1044 = vmatpush2.bf16.msra.mxu0 0
  %1045 = vmatprep.subr.bf16.mxu0 0
  %1046 = vmatpush2.bf16.msra.mxu0 0
  %1047 = vmatprep.subr.bf16.mxu0 0
  %1048 = vmatpush2.bf16.msra.mxu0 0
  %1049 = vmatprep.subr.bf16.mxu0 0
  %1050 = vmatpush2.bf16.msra.mxu0 0
  %1051 = vmatprep.subr.bf16.mxu0 0
  %1052 = vmatpush2.bf16.msra.mxu0 0
  %1053 = vmatprep.subr.bf16.mxu0 0
  %1054 = vmatpush2.bf16.msra.mxu0 0
  %1055 = vmatprep.mubr.bf16.mxu0 0
  %1056 = vmatmul.mubr.bf16.gmra.mxu0 %v1021
  %v1057 = vpop.f32.mrf.mxu0
  %v1058 = vadd.f32 0.0, %v1057
  %v1059 = vpop.f32.mrf.mxu0
  %v1060 = vpop.f32.mrf.mxu0
  %v1061 = vpop.f32.mrf.mxu0
  %1062 = vdwg.mxu0
  %v1063 = vadd.f32 %v156, %v1058
  %v1064 = vxor.u32 %v1063, 2147483648
  %v1065 = vmul.f32 %v1064, 1.442695
  %v1066 = vpow.pop %v1065
  %v1067 = vadd.f32 %v1066, 1.0
  %v1068 = vrcp.pop %v1067
  %v1069 = vmul.f32 1.0, %v1068
  %v1070 = vmul.f32 %v1069, 2.0
  %v1071 = vsub.f32 %v1070, 1.0
  %v1072 = vmul.f32 %v1069, %v896
  %1074 = vrot.lane.b32.xlu0 %v1071, 64
  %v1075 = vpop.permute.xlu0 %1074
  %v1077 = vmul.f32 %v1069, %v1075
  %1079 = vrot.lane.b32.xlu0 %v1077, 32
  %v1080 = vpop.permute.xlu0 %1079
  %v1082 = vadd.f32 %v1072, %v1080
  %v1083 = vtanh.pop %v1082
  %1085 = vrot.lane.b32.xlu0 %v1083, 64
  %v1086 = vpop.permute.xlu0 %1085
  %v1088 = vmul.f32 %v1069, %v1086
  %1089 = vmatprep.subr.bf16.mxu0 0
  %1090 = vmatpush1.bf16.msra.mxu0 0
  %1091 = vmatprep.subr.bf16.mxu0 0
  %1092 = vmatpush1.bf16.msra.mxu0 0
  %1093 = vmatprep.subr.bf16.mxu0 0
  %1094 = vmatpush1.bf16.msra.mxu0 0
  %1095 = vmatprep.subr.bf16.mxu0 0
  %1096 = vmatpush1.bf16.msra.mxu0 0
  %1097 = vmatprep.subr.bf16.mxu0 0
  %1098 = vmatpush1.bf16.msra.mxu0 0
  %1099 = vmatprep.subr.bf16.mxu0 0
  %1100 = vmatpush1.bf16.msra.mxu0 0
  %1101 = vmatprep.subr.bf16.mxu0 0
  %1102 = vmatpush1.bf16.msra.mxu0 %v337
  %1103 = vmatprep.subr.bf16.mxu0 0
  %1104 = vmatpush1.bf16.msra.mxu0 %v336
  %1105 = vmatprep.subr.bf16.mxu0 0
  %1106 = vmatpush2.bf16.msra.mxu0 0
  %1107 = vmatprep.subr.bf16.mxu0 0
  %1108 = vmatpush2.bf16.msra.mxu0 0
  %1109 = vmatprep.subr.bf16.mxu0 0
  %1110 = vmatpush2.bf16.msra.mxu0 0
  %1111 = vmatprep.subr.bf16.mxu0 0
  %1112 = vmatpush2.bf16.msra.mxu0 0
  %1113 = vmatprep.subr.bf16.mxu0 0
  %1114 = vmatpush2.bf16.msra.mxu0 0
  %1115 = vmatprep.subr.bf16.mxu0 0
  %1116 = vmatpush2.bf16.msra.mxu0 0
  %1117 = vmatprep.subr.bf16.mxu0 0
  %1118 = vmatpush2.bf16.msra.mxu0 0
  %1119 = vmatprep.subr.bf16.mxu0 0
  %1120 = vmatpush2.bf16.msra.mxu0 0
  %1121 = vmatprep.mubr.bf16.mxu0 0
  %1122 = vmatmul.mubr.bf16.gmra.mxu0 %v1021
  %v1123 = vpop.f32.mrf.mxu0
  %v1124 = vadd.f32 %v326, %v1123
  %v1125 = vpop.f32.mrf.mxu0
  %v1126 = vpop.f32.mrf.mxu0
  %v1127 = vpop.f32.mrf.mxu0
  %1128 = vdwg.mxu0
  %v1129 = vpack.c.bf16 %v1015, %v1015
  %1131 = vrot.lane.b32.xlu0 %v1129, 32
  %v1132 = vpop.permute.xlu0 %1131
  %v1134 = vsel %vm179, %v1132, 0
  %1136 = vmatprep.subr.bf16.mxu0 0
  %1137 = vmatpush1.bf16.msra.mxu0 0
  %1138 = vmatprep.subr.bf16.mxu0 0
  %1139 = vmatpush1.bf16.msra.mxu0 0
  %1140 = vmatprep.subr.bf16.mxu0 0
  %1141 = vmatpush1.bf16.msra.mxu0 0
  %1142 = vmatprep.subr.bf16.mxu0 0
  %1143 = vmatpush1.bf16.msra.mxu0 0
  %1144 = vmatprep.subr.bf16.mxu0 0
  %1145 = vmatpush1.bf16.msra.mxu0 0
  %1146 = vmatprep.subr.bf16.mxu0 0
  %1147 = vmatpush1.bf16.msra.mxu0 0
  %1148 = vmatprep.subr.bf16.mxu0 0
  %1149 = vmatpush1.bf16.msra.mxu0 %v389
  %1150 = vmatprep.subr.bf16.mxu0 0
  %1151 = vmatpush1.bf16.msra.mxu0 %v388
  %1152 = vmatprep.subr.bf16.mxu0 0
  %1153 = vmatpush2.bf16.msra.mxu0 0
  %1154 = vmatprep.subr.bf16.mxu0 0
  %1155 = vmatpush2.bf16.msra.mxu0 0
  %1156 = vmatprep.subr.bf16.mxu0 0
  %1157 = vmatpush2.bf16.msra.mxu0 0
  %1158 = vmatprep.subr.bf16.mxu0 0
  %1159 = vmatpush2.bf16.msra.mxu0 0
  %1160 = vmatprep.subr.bf16.mxu0 0
  %1161 = vmatpush2.bf16.msra.mxu0 0
  %1162 = vmatprep.subr.bf16.mxu0 0
  %1163 = vmatpush2.bf16.msra.mxu0 0
  %1164 = vmatprep.subr.bf16.mxu0 0
  %1165 = vmatpush2.bf16.msra.mxu0 0
  %1166 = vmatprep.subr.bf16.mxu0 0
  %1167 = vmatpush2.bf16.msra.mxu0 0
  %1168 = vmatprep.mubr.bf16.mxu0 0
  %1169 = vmatmul.mubr.bf16.gmra.mxu0 %v1134
  %v1170 = vpop.f32.mrf.mxu0
  %v1171 = vadd.f32 0.0, %v1170
  %v1172 = vpop.f32.mrf.mxu0
  %v1173 = vpop.f32.mrf.mxu0
  %v1174 = vpop.f32.mrf.mxu0
  %1175 = vdwg.mxu0
  %v1176 = vadd.f32 %v1124, %v1171
  %v1177 = vxor.u32 %v1176, 2147483648
  %v1178 = vmul.f32 %v1177, 1.442695
  %v1179 = vpow.pop %v1178
  %v1180 = vadd.f32 %v1179, 1.0
  %v1181 = vrcp.pop %v1180
  %v1182 = vmul.f32 1.0, %v1181
  %v1183 = vmul.f32 %v1182, 2.0
  %v1184 = vsub.f32 %v1183, 1.0
  %v1185 = vmul.f32 %v1182, %v1009
  %1187 = vrot.lane.b32.xlu0 %v1184, 64
  %v1188 = vpop.permute.xlu0 %1187
  %v1190 = vmul.f32 %v1182, %v1188
  %1192 = vrot.lane.b32.xlu0 %v1190, 32
  %v1193 = vpop.permute.xlu0 %1192
  %v1195 = vadd.f32 %v1185, %v1193
  %v1196 = vtanh.pop %v1195
  %1198 = vrot.lane.b32.xlu0 %v1196, 64
  %v1199 = vpop.permute.xlu0 %1198
  %v1201 = vmul.f32 %v1182, %v1199
  %v1202 = vpack.c.bf16 %v1088, %v1088
  %1204 = vrot.lane.b32.xlu0 %v1202, 32
  %v1205 = vpop.permute.xlu0 %1204
  %v1207 = vsel %vm179, %v1205, 0
  %1209 = vmatprep.subr.bf16.mxu0 0
  %1210 = vmatpush1.bf16.msra.mxu0 0
  %1211 = vmatprep.subr.bf16.mxu0 0
  %1212 = vmatpush1.bf16.msra.mxu0 0
  %1213 = vmatprep.subr.bf16.mxu0 0
  %1214 = vmatpush1.bf16.msra.mxu0 0
  %1215 = vmatprep.subr.bf16.mxu0 0
  %1216 = vmatpush1.bf16.msra.mxu0 0
  %1217 = vmatprep.subr.bf16.mxu0 0
  %1218 = vmatpush1.bf16.msra.mxu0 0
  %1219 = vmatprep.subr.bf16.mxu0 0
  %1220 = vmatpush1.bf16.msra.mxu0 0
  %1221 = vmatprep.subr.bf16.mxu0 0
  %1222 = vmatpush1.bf16.msra.mxu0 %v176
  %1223 = vmatprep.subr.bf16.mxu0 0
  %1224 = vmatpush1.bf16.msra.mxu0 %v175
  %1225 = vmatprep.subr.bf16.mxu0 0
  %1226 = vmatpush2.bf16.msra.mxu0 0
  %1227 = vmatprep.subr.bf16.mxu0 0
  %1228 = vmatpush2.bf16.msra.mxu0 0
  %1229 = vmatprep.subr.bf16.mxu0 0
  %1230 = vmatpush2.bf16.msra.mxu0 0
  %1231 = vmatprep.subr.bf16.mxu0 0
  %1232 = vmatpush2.bf16.msra.mxu0 0
  %1233 = vmatprep.subr.bf16.mxu0 0
  %1234 = vmatpush2.bf16.msra.mxu0 0
  %1235 = vmatprep.subr.bf16.mxu0 0
  %1236 = vmatpush2.bf16.msra.mxu0 0
  %1237 = vmatprep.subr.bf16.mxu0 0
  %1238 = vmatpush2.bf16.msra.mxu0 0
  %1239 = vmatprep.subr.bf16.mxu0 0
  %1240 = vmatpush2.bf16.msra.mxu0 0
  %1241 = vmatprep.mubr.bf16.mxu0 0
  %1242 = vmatmul.mubr.bf16.gmra.mxu0 %v1207
  %v1243 = vpop.f32.mrf.mxu0
  %v1244 = vadd.f32 0.0, %v1243
  %v1245 = vpop.f32.mrf.mxu0
  %v1246 = vpop.f32.mrf.mxu0
  %v1247 = vpop.f32.mrf.mxu0
  %1248 = vdwg.mxu0
  %v1249 = vadd.f32 %v161, %v1244
  %v1250 = vxor.u32 %v1249, 2147483648
  %v1251 = vmul.f32 %v1250, 1.442695
  %v1252 = vpow.pop %v1251
  %v1253 = vadd.f32 %v1252, 1.0
  %v1254 = vrcp.pop %v1253
  %v1255 = vmul.f32 1.0, %v1254
  %v1256 = vmul.f32 %v1255, 2.0
  %v1257 = vsub.f32 %v1256, 1.0
  %v1258 = vmul.f32 %v1255, %v1082
  %1260 = vrot.lane.b32.xlu0 %v1257, 64
  %v1261 = vpop.permute.xlu0 %1260
  %v1263 = vmul.f32 %v1255, %v1261
  %1265 = vrot.lane.b32.xlu0 %v1263, 32
  %v1266 = vpop.permute.xlu0 %1265
  %v1268 = vadd.f32 %v1258, %v1266
  %v1269 = vtanh.pop %v1268
  %1271 = vrot.lane.b32.xlu0 %v1269, 64
  %v1272 = vpop.permute.xlu0 %1271
  %v1274 = vmul.f32 %v1255, %v1272
  %1275 = vmatprep.subr.bf16.mxu0 0
  %1276 = vmatpush1.bf16.msra.mxu0 0
  %1277 = vmatprep.subr.bf16.mxu0 0
  %1278 = vmatpush1.bf16.msra.mxu0 0
  %1279 = vmatprep.subr.bf16.mxu0 0
  %1280 = vmatpush1.bf16.msra.mxu0 0
  %1281 = vmatprep.subr.bf16.mxu0 0
  %1282 = vmatpush1.bf16.msra.mxu0 0
  %1283 = vmatprep.subr.bf16.mxu0 0
  %1284 = vmatpush1.bf16.msra.mxu0 0
  %1285 = vmatprep.subr.bf16.mxu0 0
  %1286 = vmatpush1.bf16.msra.mxu0 0
  %1287 = vmatprep.subr.bf16.mxu0 0
  %1288 = vmatpush1.bf16.msra.mxu0 %v337
  %1289 = vmatprep.subr.bf16.mxu0 0
  %1290 = vmatpush1.bf16.msra.mxu0 %v336
  %1291 = vmatprep.subr.bf16.mxu0 0
  %1292 = vmatpush2.bf16.msra.mxu0 0
  %1293 = vmatprep.subr.bf16.mxu0 0
  %1294 = vmatpush2.bf16.msra.mxu0 0
  %1295 = vmatprep.subr.bf16.mxu0 0
  %1296 = vmatpush2.bf16.msra.mxu0 0
  %1297 = vmatprep.subr.bf16.mxu0 0
  %1298 = vmatpush2.bf16.msra.mxu0 0
  %1299 = vmatprep.subr.bf16.mxu0 0
  %1300 = vmatpush2.bf16.msra.mxu0 0
  %1301 = vmatprep.subr.bf16.mxu0 0
  %1302 = vmatpush2.bf16.msra.mxu0 0
  %1303 = vmatprep.subr.bf16.mxu0 0
  %1304 = vmatpush2.bf16.msra.mxu0 0
  %1305 = vmatprep.subr.bf16.mxu0 0
  %1306 = vmatpush2.bf16.msra.mxu0 0
  %1307 = vmatprep.mubr.bf16.mxu0 0
  %1308 = vmatmul.mubr.bf16.gmra.mxu0 %v1207
  %v1309 = vpop.f32.mrf.mxu0
  %v1310 = vadd.f32 %v326, %v1309
  %v1311 = vpop.f32.mrf.mxu0
  %v1312 = vpop.f32.mrf.mxu0
  %v1313 = vpop.f32.mrf.mxu0
  %1314 = vdwg.mxu0
  %v1315 = vpack.c.bf16 %v1201, %v1201
  %1317 = vrot.lane.b32.xlu0 %v1315, 32
  %v1318 = vpop.permute.xlu0 %1317
  %v1320 = vsel %vm179, %v1318, 0
  %1322 = vmatprep.subr.bf16.mxu0 0
  %1323 = vmatpush1.bf16.msra.mxu0 0
  %1324 = vmatprep.subr.bf16.mxu0 0
  %1325 = vmatpush1.bf16.msra.mxu0 0
  %1326 = vmatprep.subr.bf16.mxu0 0
  %1327 = vmatpush1.bf16.msra.mxu0 0
  %1328 = vmatprep.subr.bf16.mxu0 0
  %1329 = vmatpush1.bf16.msra.mxu0 0
  %1330 = vmatprep.subr.bf16.mxu0 0
  %1331 = vmatpush1.bf16.msra.mxu0 0
  %1332 = vmatprep.subr.bf16.mxu0 0
  %1333 = vmatpush1.bf16.msra.mxu0 0
  %1334 = vmatprep.subr.bf16.mxu0 0
  %1335 = vmatpush1.bf16.msra.mxu0 %v389
  %1336 = vmatprep.subr.bf16.mxu0 0
  %1337 = vmatpush1.bf16.msra.mxu0 %v388
  %1338 = vmatprep.subr.bf16.mxu0 0
  %1339 = vmatpush2.bf16.msra.mxu0 0
  %1340 = vmatprep.subr.bf16.mxu0 0
  %1341 = vmatpush2.bf16.msra.mxu0 0
  %1342 = vmatprep.subr.bf16.mxu0 0
  %1343 = vmatpush2.bf16.msra.mxu0 0
  %1344 = vmatprep.subr.bf16.mxu0 0
  %1345 = vmatpush2.bf16.msra.mxu0 0
  %1346 = vmatprep.subr.bf16.mxu0 0
  %1347 = vmatpush2.bf16.msra.mxu0 0
  %1348 = vmatprep.subr.bf16.mxu0 0
  %1349 = vmatpush2.bf16.msra.mxu0 0
  %1350 = vmatprep.subr.bf16.mxu0 0
  %1351 = vmatpush2.bf16.msra.mxu0 0
  %1352 = vmatprep.subr.bf16.mxu0 0
  %1353 = vmatpush2.bf16.msra.mxu0 0
  %1354 = vmatprep.mubr.bf16.mxu0 0
  %1355 = vmatmul.mubr.bf16.gmra.mxu0 %v1320
  %v1356 = vpop.f32.mrf.mxu0
  %v1357 = vadd.f32 0.0, %v1356
  %v1358 = vpop.f32.mrf.mxu0
  %v1359 = vpop.f32.mrf.mxu0
  %v1360 = vpop.f32.mrf.mxu0
  %1361 = vdwg.mxu0
  %v1362 = vadd.f32 %v1310, %v1357
  %v1363 = vxor.u32 %v1362, 2147483648
  %v1364 = vmul.f32 %v1363, 1.442695
  %v1365 = vpow.pop %v1364
  %v1366 = vadd.f32 %v1365, 1.0
  %v1367 = vrcp.pop %v1366
  %v1368 = vmul.f32 1.0, %v1367
  %v1369 = vmul.f32 %v1368, 2.0
  %v1370 = vsub.f32 %v1369, 1.0
  %v1371 = vmul.f32 %v1368, %v1195
  %1373 = vrot.lane.b32.xlu0 %v1370, 64
  %v1374 = vpop.permute.xlu0 %1373
  %v1376 = vmul.f32 %v1368, %v1374
  %1378 = vrot.lane.b32.xlu0 %v1376, 32
  %v1379 = vpop.permute.xlu0 %1378
  %v1381 = vadd.f32 %v1371, %v1379
  %v1382 = vtanh.pop %v1381
  %1384 = vrot.lane.b32.xlu0 %v1382, 64
  %v1385 = vpop.permute.xlu0 %1384
  %v1387 = vmul.f32 %v1368, %v1385
  %v1388 = vpack.c.bf16 %v1274, %v1274
  %1390 = vrot.lane.b32.xlu0 %v1388, 32
  %v1391 = vpop.permute.xlu0 %1390
  %v1393 = vsel %vm179, %v1391, 0
  %1395 = vmatprep.subr.bf16.mxu0 0
  %1396 = vmatpush1.bf16.msra.mxu0 0
  %1397 = vmatprep.subr.bf16.mxu0 0
  %1398 = vmatpush1.bf16.msra.mxu0 0
  %1399 = vmatprep.subr.bf16.mxu0 0
  %1400 = vmatpush1.bf16.msra.mxu0 0
  %1401 = vmatprep.subr.bf16.mxu0 0
  %1402 = vmatpush1.bf16.msra.mxu0 0
  %1403 = vmatprep.subr.bf16.mxu0 0
  %1404 = vmatpush1.bf16.msra.mxu0 0
  %1405 = vmatprep.subr.bf16.mxu0 0
  %1406 = vmatpush1.bf16.msra.mxu0 0
  %1407 = vmatprep.subr.bf16.mxu0 0
  %1408 = vmatpush1.bf16.msra.mxu0 %v176
  %1409 = vmatprep.subr.bf16.mxu0 0
  %1410 = vmatpush1.bf16.msra.mxu0 %v175
  %1411 = vmatprep.subr.bf16.mxu0 0
  %1412 = vmatpush2.bf16.msra.mxu0 0
  %1413 = vmatprep.subr.bf16.mxu0 0
  %1414 = vmatpush2.bf16.msra.mxu0 0
  %1415 = vmatprep.subr.bf16.mxu0 0
  %1416 = vmatpush2.bf16.msra.mxu0 0
  %1417 = vmatprep.subr.bf16.mxu0 0
  %1418 = vmatpush2.bf16.msra.mxu0 0
  %1419 = vmatprep.subr.bf16.mxu0 0
  %1420 = vmatpush2.bf16.msra.mxu0 0
  %1421 = vmatprep.subr.bf16.mxu0 0
  %1422 = vmatpush2.bf16.msra.mxu0 0
  %1423 = vmatprep.subr.bf16.mxu0 0
  %1424 = vmatpush2.bf16.msra.mxu0 0
  %1425 = vmatprep.subr.bf16.mxu0 0
  %1426 = vmatpush2.bf16.msra.mxu0 0
  %1427 = vmatprep.mubr.bf16.mxu0 0
  %1428 = vmatmul.mubr.bf16.gmra.mxu0 %v1393
  %v1429 = vpop.f32.mrf.mxu0
  %v1430 = vadd.f32 0.0, %v1429
  %v1431 = vpop.f32.mrf.mxu0
  %v1432 = vpop.f32.mrf.mxu0
  %v1433 = vpop.f32.mrf.mxu0
  %1434 = vdwg.mxu0
  %v1435 = vadd.f32 %v164, %v1430
  %v1436 = vxor.u32 %v1435, 2147483648
  %v1437 = vmul.f32 %v1436, 1.442695
  %v1438 = vpow.pop %v1437
  %v1439 = vadd.f32 %v1438, 1.0
  %v1440 = vrcp.pop %v1439
  %v1441 = vmul.f32 1.0, %v1440
  %v1442 = vmul.f32 %v1441, 2.0
  %v1443 = vsub.f32 %v1442, 1.0
  %v1444 = vmul.f32 %v1441, %v1268
  %1446 = vrot.lane.b32.xlu0 %v1443, 64
  %v1447 = vpop.permute.xlu0 %1446
  %v1449 = vmul.f32 %v1441, %v1447
  %1451 = vrot.lane.b32.xlu0 %v1449, 32
  %v1452 = vpop.permute.xlu0 %1451
  %v1454 = vadd.f32 %v1444, %v1452
  %v1455 = vtanh.pop %v1454
  %1457 = vrot.lane.b32.xlu0 %v1455, 64
  %v1458 = vpop.permute.xlu0 %1457
  %v1460 = vmul.f32 %v1441, %v1458
  %1461 = vmatprep.subr.bf16.mxu0 0
  %1462 = vmatpush1.bf16.msra.mxu0 0
  %1463 = vmatprep.subr.bf16.mxu0 0
  %1464 = vmatpush1.bf16.msra.mxu0 0
  %1465 = vmatprep.subr.bf16.mxu0 0
  %1466 = vmatpush1.bf16.msra.mxu0 0
  %1467 = vmatprep.subr.bf16.mxu0 0
  %1468 = vmatpush1.bf16.msra.mxu0 0
  %1469 = vmatprep.subr.bf16.mxu0 0
  %1470 = vmatpush1.bf16.msra.mxu0 0
  %1471 = vmatprep.subr.bf16.mxu0 0
  %1472 = vmatpush1.bf16.msra.mxu0 0
  %1473 = vmatprep.subr.bf16.mxu0 0
  %1474 = vmatpush1.bf16.msra.mxu0 %v337
  %1475 = vmatprep.subr.bf16.mxu0 0
  %1476 = vmatpush1.bf16.msra.mxu0 %v336
  %1477 = vmatprep.subr.bf16.mxu0 0
  %1478 = vmatpush2.bf16.msra.mxu0 0
  %1479 = vmatprep.subr.bf16.mxu0 0
  %1480 = vmatpush2.bf16.msra.mxu0 0
  %1481 = vmatprep.subr.bf16.mxu0 0
  %1482 = vmatpush2.bf16.msra.mxu0 0
  %1483 = vmatprep.subr.bf16.mxu0 0
  %1484 = vmatpush2.bf16.msra.mxu0 0
  %1485 = vmatprep.subr.bf16.mxu0 0
  %1486 = vmatpush2.bf16.msra.mxu0 0
  %1487 = vmatprep.subr.bf16.mxu0 0
  %1488 = vmatpush2.bf16.msra.mxu0 0
  %1489 = vmatprep.subr.bf16.mxu0 0
  %1490 = vmatpush2.bf16.msra.mxu0 0
  %1491 = vmatprep.subr.bf16.mxu0 0
  %1492 = vmatpush2.bf16.msra.mxu0 0
  %1493 = vmatprep.mubr.bf16.mxu0 0
  %1494 = vmatmul.mubr.bf16.gmra.mxu0 %v1393
  %v1495 = vpop.f32.mrf.mxu0
  %v1496 = vadd.f32 %v326, %v1495
  %v1497 = vpop.f32.mrf.mxu0
  %v1498 = vpop.f32.mrf.mxu0
  %v1499 = vpop.f32.mrf.mxu0
  %1500 = vdwg.mxu0
  %v1501 = vpack.c.bf16 %v1387, %v1387
  %1503 = vrot.lane.b32.xlu0 %v1501, 32
  %v1504 = vpop.permute.xlu0 %1503
  %v1506 = vsel %vm179, %v1504, 0
  %1508 = vmatprep.subr.bf16.mxu0 0
  %1509 = vmatpush1.bf16.msra.mxu0 0
  %1510 = vmatprep.subr.bf16.mxu0 0
  %1511 = vmatpush1.bf16.msra.mxu0 0
  %1512 = vmatprep.subr.bf16.mxu0 0
  %1513 = vmatpush1.bf16.msra.mxu0 0
  %1514 = vmatprep.subr.bf16.mxu0 0
  %1515 = vmatpush1.bf16.msra.mxu0 0
  %1516 = vmatprep.subr.bf16.mxu0 0
  %1517 = vmatpush1.bf16.msra.mxu0 0
  %1518 = vmatprep.subr.bf16.mxu0 0
  %1519 = vmatpush1.bf16.msra.mxu0 0
  %1520 = vmatprep.subr.bf16.mxu0 0
  %1521 = vmatpush1.bf16.msra.mxu0 %v389
  %1522 = vmatprep.subr.bf16.mxu0 0
  %1523 = vmatpush1.bf16.msra.mxu0 %v388
  %1524 = vmatprep.subr.bf16.mxu0 0
  %1525 = vmatpush2.bf16.msra.mxu0 0
  %1526 = vmatprep.subr.bf16.mxu0 0
  %1527 = vmatpush2.bf16.msra.mxu0 0
  %1528 = vmatprep.subr.bf16.mxu0 0
  %1529 = vmatpush2.bf16.msra.mxu0 0
  %1530 = vmatprep.subr.bf16.mxu0 0
  %1531 = vmatpush2.bf16.msra.mxu0 0
  %1532 = vmatprep.subr.bf16.mxu0 0
  %1533 = vmatpush2.bf16.msra.mxu0 0
  %1534 = vmatprep.subr.bf16.mxu0 0
  %1535 = vmatpush2.bf16.msra.mxu0 0
  %1536 = vmatprep.subr.bf16.mxu0 0
  %1537 = vmatpush2.bf16.msra.mxu0 0
  %1538 = vmatprep.subr.bf16.mxu0 0
  %1539 = vmatpush2.bf16.msra.mxu0 0
  %1540 = vmatprep.mubr.bf16.mxu0 0
  %1541 = vmatmul.mubr.bf16.gmra.mxu0 %v1506
  %v1542 = vpop.f32.mrf.mxu0
  %v1543 = vadd.f32 0.0, %v1542
  %v1544 = vpop.f32.mrf.mxu0
  %v1545 = vpop.f32.mrf.mxu0
  %v1546 = vpop.f32.mrf.mxu0
  %1547 = vdwg.mxu0
  %v1548 = vadd.f32 %v1496, %v1543
  %v1549 = vxor.u32 %v1548, 2147483648
  %v1550 = vmul.f32 %v1549, 1.442695
  %v1551 = vpow.pop %v1550
  %v1552 = vadd.f32 %v1551, 1.0
  %v1553 = vrcp.pop %v1552
  %v1554 = vmul.f32 1.0, %v1553
  %v1555 = vmul.f32 %v1554, 2.0
  %v1556 = vsub.f32 %v1555, 1.0
  %v1557 = vmul.f32 %v1554, %v1381
  %1559 = vrot.lane.b32.xlu0 %v1556, 64
  %v1560 = vpop.permute.xlu0 %1559
  %v1562 = vmul.f32 %v1554, %v1560
  %1564 = vrot.lane.b32.xlu0 %v1562, 32
  %v1565 = vpop.permute.xlu0 %1564
  %v1567 = vadd.f32 %v1557, %v1565
  %v1568 = vtanh.pop %v1567
  %1570 = vrot.lane.b32.xlu0 %v1568, 64
  %v1571 = vpop.permute.xlu0 %1570
  %v1573 = vmul.f32 %v1554, %v1571
  %v1574 = vpack.c.bf16 %v1460, %v1460
  %1576 = vrot.lane.b32.xlu0 %v1574, 32
  %v1577 = vpop.permute.xlu0 %1576
  %v1579 = vsel %vm179, %v1577, 0
  %1581 = vmatprep.subr.bf16.mxu0 0
  %1582 = vmatpush1.bf16.msra.mxu0 0
  %1583 = vmatprep.subr.bf16.mxu0 0
  %1584 = vmatpush1.bf16.msra.mxu0 0
  %1585 = vmatprep.subr.bf16.mxu0 0
  %1586 = vmatpush1.bf16.msra.mxu0 0
  %1587 = vmatprep.subr.bf16.mxu0 0
  %1588 = vmatpush1.bf16.msra.mxu0 0
  %1589 = vmatprep.subr.bf16.mxu0 0
  %1590 = vmatpush1.bf16.msra.mxu0 0
  %1591 = vmatprep.subr.bf16.mxu0 0
  %1592 = vmatpush1.bf16.msra.mxu0 0
  %1593 = vmatprep.subr.bf16.mxu0 0
  %1594 = vmatpush1.bf16.msra.mxu0 %v337
  %1595 = vmatprep.subr.bf16.mxu0 0
  %1596 = vmatpush1.bf16.msra.mxu0 %v336
  %1597 = vmatprep.subr.bf16.mxu0 0
  %1598 = vmatpush2.bf16.msra.mxu0 0
  %1599 = vmatprep.subr.bf16.mxu0 0
  %1600 = vmatpush2.bf16.msra.mxu0 0
  %1601 = vmatprep.subr.bf16.mxu0 0
  %1602 = vmatpush2.bf16.msra.mxu0 0
  %1603 = vmatprep.subr.bf16.mxu0 0
  %1604 = vmatpush2.bf16.msra.mxu0 0
  %1605 = vmatprep.subr.bf16.mxu0 0
  %1606 = vmatpush2.bf16.msra.mxu0 0
  %1607 = vmatprep.subr.bf16.mxu0 0
  %1608 = vmatpush2.bf16.msra.mxu0 0
  %1609 = vmatprep.subr.bf16.mxu0 0
  %1610 = vmatpush2.bf16.msra.mxu0 0
  %1611 = vmatprep.subr.bf16.mxu0 0
  %1612 = vmatpush2.bf16.msra.mxu0 0
  %1613 = vmatprep.mubr.bf16.mxu0 0
  %1614 = vmatmul.mubr.bf16.gmra.mxu0 %v1579
  %v1615 = vpop.f32.mrf.mxu0
  %v1616 = vadd.f32 %v326, %v1615
  %v1617 = vpop.f32.mrf.mxu0
  %v1618 = vpop.f32.mrf.mxu0
  %v1619 = vpop.f32.mrf.mxu0
  %1620 = vdwg.mxu0
  %v1621 = vpack.c.bf16 %v1573, %v1573
  %1623 = vrot.lane.b32.xlu0 %v1621, 32
  %v1624 = vpop.permute.xlu0 %1623
  %v1626 = vsel %vm179, %v1624, 0
  %1628 = vmatprep.subr.bf16.mxu0 0
  %1629 = vmatpush1.bf16.msra.mxu0 0
  %1630 = vmatprep.subr.bf16.mxu0 0
  %1631 = vmatpush1.bf16.msra.mxu0 0
  %1632 = vmatprep.subr.bf16.mxu0 0
  %1633 = vmatpush1.bf16.msra.mxu0 0
  %1634 = vmatprep.subr.bf16.mxu0 0
  %1635 = vmatpush1.bf16.msra.mxu0 0
  %1636 = vmatprep.subr.bf16.mxu0 0
  %1637 = vmatpush1.bf16.msra.mxu0 0
  %1638 = vmatprep.subr.bf16.mxu0 0
  %1639 = vmatpush1.bf16.msra.mxu0 0
  %1640 = vmatprep.subr.bf16.mxu0 0
  %1641 = vmatpush1.bf16.msra.mxu0 %v389
  %1642 = vmatprep.subr.bf16.mxu0 0
  %1643 = vmatpush1.bf16.msra.mxu0 %v388
  %1644 = vmatprep.subr.bf16.mxu0 0
  %1645 = vmatpush2.bf16.msra.mxu0 0
  %1646 = vmatprep.subr.bf16.mxu0 0
  %1647 = vmatpush2.bf16.msra.mxu0 0
  %1648 = vmatprep.subr.bf16.mxu0 0
  %1649 = vmatpush2.bf16.msra.mxu0 0
  %1650 = vmatprep.subr.bf16.mxu0 0
  %1651 = vmatpush2.bf16.msra.mxu0 0
  %1652 = vmatprep.subr.bf16.mxu0 0
  %1653 = vmatpush2.bf16.msra.mxu0 0
  %1654 = vmatprep.subr.bf16.mxu0 0
  %1655 = vmatpush2.bf16.msra.mxu0 0
  %1656 = vmatprep.subr.bf16.mxu0 0
  %1657 = vmatpush2.bf16.msra.mxu0 0
  %1658 = vmatprep.subr.bf16.mxu0 0
  %1659 = vmatpush2.bf16.msra.mxu0 0
  %1660 = vmatprep.mubr.bf16.mxu0 0
  %1661 = vmatmul.mubr.bf16.gmra.mxu0 %v1626
  %v1662 = vpop.f32.mrf.mxu0
  %v1663 = vadd.f32 0.0, %v1662
  %v1664 = vpop.f32.mrf.mxu0
  %v1665 = vpop.f32.mrf.mxu0
  %v1666 = vpop.f32.mrf.mxu0
  %1667 = vdwg.mxu0
  %v1668 = vadd.f32 %v1616, %v1663
  %v1669 = vxor.u32 %v1668, 2147483648
  %v1670 = vmul.f32 %v1669, 1.442695
  %v1671 = vpow.pop %v1670
  %v1672 = vadd.f32 %v1671, 1.0
  %v1673 = vrcp.pop %v1672
  %v1674 = vmul.f32 1.0, %v1673
  %v1675 = vmul.f32 %v1674, 2.0
  %v1676 = vsub.f32 %v1675, 1.0
  %v1677 = vmul.f32 %v1674, %v1567
  %1679 = vrot.lane.b32.xlu0 %v1676, 64
  %v1680 = vpop.permute.xlu0 %1679
  %v1682 = vmul.f32 %v1674, %v1680
  %1684 = vrot.lane.b32.xlu0 %v1682, 32
  %v1685 = vpop.permute.xlu0 %1684
  %v1687 = vadd.f32 %v1677, %v1685
  %v1688 = vtanh.pop %v1687
  %1690 = vrot.lane.b32.xlu0 %v1688, 64
  %v1691 = vpop.permute.xlu0 %1690
  %v1693 = vmul.f32 %v1674, %v1691
  %v1694 = vpack.c.bf16 %v1693, %v1693
  %v1695 = vld [vmem:[%s7] sm:$0xf]
  %v1696 = vld [vmem:[%s7 + $0x4] sm:$0xf]
  %v1697 = vld [vmem:[%s7 + $0x8] sm:$0xf]
  %v1698 = vld [vmem:[%s7 + $0xc] sm:$0xf]
  %v1699 = vld [vmem:[%s8] sm:$0x1]
  %v1701 = vlaneseq
  %v1702 = vshrl.u32 %v1701, 7
  %v1703 = vsub.s32 0, %v1702
  %v1704 = vrot.slane %v1699, %v1703
  %1707 = vrot.lane.b32.xlu0 %v1694, 32
  %v1708 = vpop.permute.xlu0 %1707
  %v1713 = vunpack.c.l.b16 %v1695
  %v1714 = vunpack.c.l.b16 %v1696
  %v1715 = vunpack.c.l.b16 %v1697
  %v1716 = vunpack.c.l.b16 %v1698
  %v1717 = vpack.c.b16 %v1714, %v1713
  %v1718 = vpack.c.b16 %v1716, %v1715
  %v1722 = vsel %vm179, %v1708, 0
  %1724 = vmatprep.subr.bf16.mxu0 0
  %1725 = vmatpush1.bf16.msra.mxu0 0
  %1726 = vmatprep.subr.bf16.mxu0 0
  %1727 = vmatpush1.bf16.msra.mxu0 0
  %1728 = vmatprep.subr.bf16.mxu0 0
  %1729 = vmatpush1.bf16.msra.mxu0 0
  %1730 = vmatprep.subr.bf16.mxu0 0
  %1731 = vmatpush1.bf16.msra.mxu0 0
  %1732 = vmatprep.subr.bf16.mxu0 0
  %1733 = vmatpush1.bf16.msra.mxu0 0
  %1734 = vmatprep.subr.bf16.mxu0 0
  %1735 = vmatpush1.bf16.msra.mxu0 0
  %1736 = vmatprep.subr.bf16.mxu0 0
  %1737 = vmatpush1.bf16.msra.mxu0 %v1718
  %1738 = vmatprep.subr.bf16.mxu0 0
  %1739 = vmatpush1.bf16.msra.mxu0 %v1717
  %1740 = vmatprep.subr.bf16.mxu0 0
  %1741 = vmatpush2.bf16.msra.mxu0 0
  %1742 = vmatprep.subr.bf16.mxu0 0
  %1743 = vmatpush2.bf16.msra.mxu0 0
  %1744 = vmatprep.subr.bf16.mxu0 0
  %1745 = vmatpush2.bf16.msra.mxu0 0
  %1746 = vmatprep.subr.bf16.mxu0 0
  %1747 = vmatpush2.bf16.msra.mxu0 0
  %1748 = vmatprep.subr.bf16.mxu0 0
  %1749 = vmatpush2.bf16.msra.mxu0 0
  %1750 = vmatprep.subr.bf16.mxu0 0
  %1751 = vmatpush2.bf16.msra.mxu0 0
  %1752 = vmatprep.subr.bf16.mxu0 0
  %1753 = vmatpush2.bf16.msra.mxu0 0
  %1754 = vmatprep.subr.bf16.mxu0 0
  %1755 = vmatpush2.bf16.msra.mxu0 0
  %1756 = vmatprep.mubr.bf16.mxu0 0
  %1757 = vmatmul.mubr.bf16.gmra.mxu0 %v1722
  %v1758 = vpop.f32.mrf.mxu0
  %v1759 = vadd.f32 %v1704, %v1758
  %v1760 = vpop.f32.mrf.mxu0
  %v1761 = vpop.f32.mrf.mxu0
  %v1762 = vpop.f32.mrf.mxu0
  %1763 = vdwg.mxu0
  %vm1764 = vcmask 31744
  %1765 = vst.msk [vmem:[%s9] sm:$0xff] %vm1764, %v1759
  // Predicated region
  $region38: #{recurrent_actor_prob_forward.1} parent=0 // pred_check
    _
  $region39: #{recurrent_actor_prob_forward.1} parent=0 // pred_check_branch
    %1767 = sbr.rel (0) target = $region41
  $region40: #{recurrent_actor_prob_forward.1} parent=0 // pred_region
    _
  $region41: #{recurrent_actor_prob_forward.1} parent=0 // pred_fallthru
    _
  // Predicated region
  $region42: #{recurrent_actor_prob_forward.1} parent=0 // pred_check
    _
  $region43: #{recurrent_actor_prob_forward.1} parent=0 // pred_check_branch
    %1769 = sbr.rel (0) target = $region45
  $region44: #{recurrent_actor_prob_forward.1} parent=0 // pred_region
    _
  $region45: #{recurrent_actor_prob_forward.1} parent=0 // pred_fallthru
    _

</llo_original>
